<compile_context>
chip_gen: v7x
topology: tpu7x:2x2x1
jax: 0.10.0
libtpu: 0.0.40
codegen_flags: <defaults>
</compile_context>

<pallas_src>
import jax
import jax.numpy as jnp
from jax.experimental import pallas as pl
from jax.experimental.pallas import tpu as pltpu

FIELDS = ["user_id", "item_id", "category", "brand"]
EMB_DIM = 16
NUM_CROSS = 6
INPUT_DIM = EMB_DIM * (len(FIELDS) + 1)   # 4 categorical embeddings + price embed = 80
D_PAD = 128                               # feature dim padded for lane density
H1 = 128
H2 = 64
H2_PAD = 128                              # hidden2 padded for lane density
LN_EPS = 1e-5
MAX_TILE_B = 2048                         # VMEM for x0 tile: 2*2048*128*2B = 1 MiB


def dcnv2_kernel(x0_ref, cw_ref, cparams_ref, w1_ref, w2_ref, misc_ref, out_ref):
    """Cross-network + MLP head for one batch tile.

    x0_ref      : [TILE_B, 128] bf16 (features 80..127 zero pad; pad rows zero)
    cw_ref      : [6, 128, 128] bf16 cross weights (pad rows/cols zero)
    cparams_ref : [6, 3, 128] f32  -> rows: cross bias / gamma / beta (pads zero)
    w1_ref      : [128, 128] bf16      w2_ref : [128, 128] bf16 (pad rows/cols zero)
    misc_ref    : [4, 128] f32 -> rows: b1 / b2 / w3-row / b3-in-lane-0 (pads zero)
    out_ref     : [TILE_B, 1] f32
    """
    x0 = x0_ref[...].astype(jnp.float32)                 # f32 [TILE_B, 128]
    inv_d = jnp.float32(1.0 / INPUT_DIM)

    # Cross layers: x <- LayerNorm(x0 * (x @ W_i + b_i) + x)  (stats over 80 feats)
    x = x0
    for i in range(NUM_CROSS):
        cb = cparams_ref[i, 0:1, :]                      # [1, 128]
        gam = cparams_ref[i, 1:2, :]
        bet = cparams_ref[i, 2:3, :]
        lin = jnp.dot(x.astype(jnp.bfloat16), cw_ref[i],
                      preferred_element_type=jnp.float32) + cb
        y = x0 * lin + x                                 # pad lanes stay exactly 0
        # One-pass LayerNorm moments (pad lanes of y are zero, divide by 80).
        sum_y = jnp.sum(y, axis=-1, keepdims=True)
        sum_y2 = jnp.sum(y * y, axis=-1, keepdims=True)
        mean = sum_y * inv_d
        var = sum_y2 * inv_d - mean * mean
        rstd = jax.lax.rsqrt(var + LN_EPS)
        x = (y - mean) * rstd * gam + bet                # gamma/beta pads = 0 -> x pads = 0

    # MLP head: Linear(80,128) -> ReLU -> Linear(128,64) -> ReLU -> Linear(64,1)
    # TODO(synk): Dropout(0.3) layers are identity in eval mode; not applied here.
    b1 = misc_ref[0:1, :]
    b2 = misc_ref[1:2, :]
    w3 = misc_ref[2:3, :]
    b3 = misc_ref[3:4, 0:1]                              # [1, 1]
    h = jnp.maximum(
        jnp.dot(x.astype(jnp.bfloat16), w1_ref[...],
                preferred_element_type=jnp.float32) + b1, 0.0)
    h = jnp.maximum(
        jnp.dot(h.astype(jnp.bfloat16), w2_ref[...],
                preferred_element_type=jnp.float32) + b2, 0.0)
    # Final 64->1 projection on the VPU/XLU (lane mul + lane sum), no N=1 MXU pass.
    # TODO(synk): output block is (TILE_B, 1) -> lane-sparse stores; tiny vs. LN cost.
    out_ref[...] = jnp.sum(h * w3, axis=-1, keepdims=True) + b3


def init_params(key, field_dims):
    """Deterministic synthetic parameter init (shapes match the PyTorch module).

    Linear weights are stored already transposed to [in, out] for direct matmul.
    """
    keys = jax.random.split(key, 16)
    p = {}
    p["emb"] = {}
    for i, (name, dim) in enumerate(field_dims.items()):
        p["emb"][name] = jax.random.normal(keys[i], (dim, EMB_DIM), jnp.float32)
    # price_proj: Linear(1, 16)
    p["price_w"] = 0.1 * jax.random.normal(keys[4], (EMB_DIM,), jnp.float32)
    p["price_b"] = 0.01 * jax.random.normal(keys[5], (EMB_DIM,), jnp.float32)
    # Cross layers: 6 x Linear(80, 80)
    p["cross_w"] = 0.05 * jax.random.normal(
        keys[6], (NUM_CROSS, INPUT_DIM, INPUT_DIM), jnp.float32)
    p["cross_b"] = 0.01 * jax.random.normal(
        keys[7], (NUM_CROSS, 1, INPUT_DIM), jnp.float32)
    # LayerNorm params (PyTorch init: gamma=1, beta=0)
    p["gamma"] = jnp.ones((NUM_CROSS, 1, INPUT_DIM), jnp.float32)
    p["beta"] = jnp.zeros((NUM_CROSS, 1, INPUT_DIM), jnp.float32)
    # MLP
    p["w1"] = 0.05 * jax.random.normal(keys[8], (INPUT_DIM, H1), jnp.float32)
    p["b1"] = 0.01 * jax.random.normal(keys[9], (1, H1), jnp.float32)
    p["w2"] = 0.05 * jax.random.normal(keys[10], (H1, H2), jnp.float32)
    p["b2"] = 0.01 * jax.random.normal(keys[11], (1, H2), jnp.float32)
    p["w3"] = 0.05 * jax.random.normal(keys[12], (H2, 1), jnp.float32)
    p["b3"] = 0.01 * jax.random.normal(keys[13], (1, 1), jnp.float32)
    return p


def _prep_kernel_params(params):
    """Zero-pad to lane-dense shapes, pack small params, pre-cast matmuls to bf16."""
    pad_f = D_PAD - INPUT_DIM       # 48
    pad_h2 = H2_PAD - H2            # 64
    cw = jnp.pad(params["cross_w"], ((0, 0), (0, pad_f), (0, pad_f))
                 ).astype(jnp.bfloat16)                              # [6,128,128] bf16
    cb = jnp.pad(params["cross_b"], ((0, 0), (0, 0), (0, pad_f)))    # [6,1,128]
    gam = jnp.pad(params["gamma"], ((0, 0), (0, 0), (0, pad_f)))     # pad gamma = 0
    bet = jnp.pad(params["beta"], ((0, 0), (0, 0), (0, pad_f)))
    cparams = jnp.concatenate([cb, gam, bet], axis=1)                # [6,3,128] f32
    w1 = jnp.pad(params["w1"], ((0, pad_f), (0, 0))).astype(jnp.bfloat16)   # [128,128]
    w2 = jnp.pad(params["w2"], ((0, 0), (0, pad_h2))).astype(jnp.bfloat16)  # [128,128]
    misc = jnp.concatenate([
        params["b1"],                                                # [1,128]
        jnp.pad(params["b2"], ((0, 0), (0, pad_h2))),                # [1,128]
        jnp.pad(params["w3"][:, 0][None, :], ((0, 0), (0, pad_h2))), # [1,128]
        jnp.pad(params["b3"], ((0, 0), (0, D_PAD - 1))),             # b3 in lane 0
    ], axis=0)                                                       # [4,128] f32
    return cw, cparams, w1, w2, misc


def _choose_tile_b(batch):
    """Adaptive batch tile: big tiles for big batches (amortize per-step overhead),
    >= 2 tiles for small batches (v7x megacore sharding + DMA pipelining)."""
    tile = max(64, pl.next_power_of_2(pl.cdiv(batch, 2)))
    return min(tile, MAX_TILE_B)


def dcnv2_forward(x_cat, price, params):
    """x_cat: list of 4 int32 [B] index arrays, price: float32 [B] -> float32 [B]."""
    # Glue: embedding gathers + price projection + concat to x0 [B, 80]
    embs = [params["emb"][name][x_cat[i]] for i, name in enumerate(FIELDS)]
    price_embed = price[:, None] * params["price_w"][None, :] + params["price_b"][None, :]
    x0 = jnp.concatenate(embs + [price_embed], axis=1).astype(jnp.float32)
    B = x0.shape[0]

    tile_b = _choose_tile_b(B)
    num_tiles = pl.cdiv(B, tile_b)
    b_pad = num_tiles * tile_b
    # Pad batch/features (pad rows & lanes are zero) and stream x0 as bf16.
    x0p = jnp.pad(x0, ((0, b_pad - B), (0, D_PAD - INPUT_DIM))).astype(jnp.bfloat16)

    cw, cparams, w1, w2, misc = _prep_kernel_params(params)

    in_specs = [
        pl.BlockSpec((tile_b, D_PAD), lambda i: (i, 0)),               # x0 tile (streamed)
        pl.BlockSpec((NUM_CROSS, D_PAD, D_PAD), lambda i: (0, 0, 0)),  # cross_w (resident)
        pl.BlockSpec((NUM_CROSS, 3, D_PAD), lambda i: (0, 0, 0)),      # cb/gamma/beta pack
        pl.BlockSpec((D_PAD, H1), lambda i: (0, 0)),                   # w1
        pl.BlockSpec((H1, H2_PAD), lambda i: (0, 0)),                  # w2
        pl.BlockSpec((4, D_PAD), lambda i: (0, 0)),                    # b1/b2/w3/b3 pack
    ]
    out = pl.pallas_call(
        dcnv2_kernel,
        out_shape=jax.ShapeDtypeStruct((b_pad, 1), jnp.float32),
        grid=(num_tiles,),
        in_specs=in_specs,
        out_specs=pl.BlockSpec((tile_b, 1), lambda i: (i, 0)),
        compiler_params=pltpu.CompilerParams(
            dimension_semantics=("parallel",),
            # ~1 MiB double-buffered x0 at tile_b=2048 + ~0.5 MiB weights + f32
            # intermediates; comfortably under v7x's 64 MiB physical VMEM.
            vmem_limit_bytes=32 * 1024 * 1024,
        ),
    )(x0p, cw, cparams, w1, w2, misc)
    return out[:B, 0]   # squeeze(1), drop batch padding (pad rows carry bias garbage)


if __name__ == "__main__":
    key = jax.random.PRNGKey(0)
    k_param, k_u, k_i, k_c, k_b, k_p = jax.random.split(key, 6)

    # Synthetic vocab sizes standing in for the CSV-derived field_dims.
    field_dims = {"user_id": 50, "item_id": 40, "category": 8, "brand": 12}
    params = init_params(k_param, field_dims)

    B = 128   # matches the sample(n=128) batch in the original script
    x_cat = [
        jax.random.randint(k_u, (B,), 0, field_dims["user_id"], dtype=jnp.int32),
        jax.random.randint(k_i, (B,), 0, field_dims["item_id"], dtype=jnp.int32),
        jax.random.randint(k_c, (B,), 0, field_dims["category"], dtype=jnp.int32),
        jax.random.randint(k_b, (B,), 0, field_dims["brand"], dtype=jnp.int32),
    ]
    price = jax.random.normal(k_p, (B,), jnp.float32)

    out = dcnv2_forward(x_cat, price, params)
    jax.block_until_ready(out)
    assert out.shape == (B,) and out.dtype == jnp.float32
    assert bool(jnp.all(jnp.isfinite(out)))
    print("KERNEL_OK")
</pallas_src>

<mosaic_0001>
module attributes {stable_mosaic.version = 11 : i64} {
  func.func @dcnv2_kernel(%arg0: i32, %arg1: memref<64x128xbf16, #tpu.memory_space<vmem>>, %arg2: memref<6x128x128xbf16, #tpu.memory_space<vmem>>, %arg3: memref<6x3x128xf32, #tpu.memory_space<vmem>>, %arg4: memref<128x128xbf16, #tpu.memory_space<vmem>>, %arg5: memref<128x128xbf16, #tpu.memory_space<vmem>>, %arg6: memref<4x128xf32, #tpu.memory_space<vmem>>, %arg7: memref<64x1xf32, #tpu.memory_space<vmem>>) attributes {dimension_semantics = [#tpu.dimension_semantics<parallel>], iteration_bounds = array<i64: 2>, scalar_prefetch = 0 : i64, scratch_operands = 0 : i64, tpu.core_type = #tpu.core_type<tc>, window_params = [{transform_indices = @transform_0, window_bounds = array<i64: 64, 128>}, {pipeline_mode = #tpu.pipeline_mode<synchronous>, transform_indices = @transform_1, window_bounds = array<i64: 6, 128, 128>}, {pipeline_mode = #tpu.pipeline_mode<synchronous>, transform_indices = @transform_2, window_bounds = array<i64: 6, 3, 128>}, {pipeline_mode = #tpu.pipeline_mode<synchronous>, transform_indices = @transform_3, window_bounds = array<i64: 128, 128>}, {pipeline_mode = #tpu.pipeline_mode<synchronous>, transform_indices = @transform_4, window_bounds = array<i64: 128, 128>}, {pipeline_mode = #tpu.pipeline_mode<synchronous>, transform_indices = @transform_5, window_bounds = array<i64: 4, 128>}, {transform_indices = @transform_6, window_bounds = array<i64: 64, 1>}]} {
    %c0 = arith.constant 0 : index
    %c0_0 = arith.constant 0 : index
    %0 = vector.load %arg1[%c0, %c0_0] : memref<64x128xbf16, #tpu.memory_space<vmem>>, vector<64x128xbf16>
    %1 = arith.extf %0 : vector<64x128xbf16> to vector<64x128xf32>
    %c0_1 = arith.constant 0 : index
    %c0_2 = arith.constant 0 : index
    %c0_3 = arith.constant 0 : index
    %2 = vector.load %arg3[%c0_1, %c0_2, %c0_3] : memref<6x3x128xf32, #tpu.memory_space<vmem>>, vector<1x1x128xf32>
    %3 = vector.shape_cast %2 : vector<1x1x128xf32> to vector<1x128xf32>
    %c0_4 = arith.constant 0 : index
    %c1 = arith.constant 1 : index
    %c0_5 = arith.constant 0 : index
    %4 = vector.load %arg3[%c0_4, %c1, %c0_5] : memref<6x3x128xf32, #tpu.memory_space<vmem>>, vector<1x1x128xf32>
    %5 = vector.shape_cast %4 : vector<1x1x128xf32> to vector<1x128xf32>
    %c0_6 = arith.constant 0 : index
    %c2 = arith.constant 2 : index
    %c0_7 = arith.constant 0 : index
    %6 = vector.load %arg3[%c0_6, %c2, %c0_7] : memref<6x3x128xf32, #tpu.memory_space<vmem>>, vector<1x1x128xf32>
    %7 = vector.shape_cast %6 : vector<1x1x128xf32> to vector<1x128xf32>
    %8 = arith.truncf %1 : vector<64x128xf32> to vector<64x128xbf16>
    %c0_8 = arith.constant 0 : index
    %c0_9 = arith.constant 0 : index
    %c0_10 = arith.constant 0 : index
    %9 = vector.load %arg2[%c0_8, %c0_9, %c0_10] : memref<6x128x128xbf16, #tpu.memory_space<vmem>>, vector<1x128x128xbf16>
    %10 = vector.shape_cast %9 : vector<1x128x128xbf16> to vector<128x128xbf16>
    %cst = arith.constant dense<0.000000e+00> : vector<64x128xf32>
    %11 = tpu.matmul %8, %10, %cst {dimension_numbers = #tpu.dot_dimension_numbers<[1], [0], [0], [1], [0, 0, 1, 1], [], []>} : vector<64x128xbf16>, vector<128x128xbf16>, vector<64x128xf32> -> vector<64x128xf32>
    %12 = vector.broadcast %3 : vector<1x128xf32> to vector<64x128xf32>
    %13 = arith.addf %11, %12 : vector<64x128xf32>
    %14 = arith.mulf %1, %13 : vector<64x128xf32>
    %15 = arith.addf %14, %1 : vector<64x128xf32>
    %cst_11 = arith.constant dense<0.000000e+00> : vector<64xf32>
    %16 = vector.multi_reduction <add>, %15, %cst_11 [1] : vector<64x128xf32> to vector<64xf32>
    %17 = vector.shape_cast %16 : vector<64xf32> to vector<64x1xf32>
    %18 = arith.mulf %15, %15 : vector<64x128xf32>
    %cst_12 = arith.constant dense<0.000000e+00> : vector<64xf32>
    %19 = vector.multi_reduction <add>, %18, %cst_12 [1] : vector<64x128xf32> to vector<64xf32>
    %20 = vector.shape_cast %19 : vector<64xf32> to vector<64x1xf32>
    %cst_13 = arith.constant 1.250000e-02 : f32
    %21 = vector.broadcast %cst_13 : f32 to vector<64x1xf32>
    %22 = arith.mulf %17, %21 : vector<64x1xf32>
    %cst_14 = arith.constant 1.250000e-02 : f32
    %23 = vector.broadcast %cst_14 : f32 to vector<64x1xf32>
    %24 = arith.mulf %20, %23 : vector<64x1xf32>
    %25 = arith.mulf %22, %22 : vector<64x1xf32>
    %26 = arith.subf %24, %25 : vector<64x1xf32>
    %cst_15 = arith.constant 9.99999974E-6 : f32
    %27 = vector.broadcast %cst_15 : f32 to vector<64x1xf32>
    %28 = arith.addf %26, %27 : vector<64x1xf32>
    %29 = math.rsqrt %28 : vector<64x1xf32>
    %30 = vector.broadcast %22 : vector<64x1xf32> to vector<64x128xf32>
    %31 = arith.subf %15, %30 : vector<64x128xf32>
    %32 = vector.broadcast %29 : vector<64x1xf32> to vector<64x128xf32>
    %33 = arith.mulf %31, %32 : vector<64x128xf32>
    %34 = vector.broadcast %5 : vector<1x128xf32> to vector<64x128xf32>
    %35 = arith.mulf %33, %34 : vector<64x128xf32>
    %36 = vector.broadcast %7 : vector<1x128xf32> to vector<64x128xf32>
    %37 = arith.addf %35, %36 : vector<64x128xf32>
    %c1_16 = arith.constant 1 : index
    %c0_17 = arith.constant 0 : index
    %c0_18 = arith.constant 0 : index
    %38 = vector.load %arg3[%c1_16, %c0_17, %c0_18] : memref<6x3x128xf32, #tpu.memory_space<vmem>>, vector<1x1x128xf32>
    %39 = vector.shape_cast %38 : vector<1x1x128xf32> to vector<1x128xf32>
    %c1_19 = arith.constant 1 : index
    %c1_20 = arith.constant 1 : index
    %c0_21 = arith.constant 0 : index
    %40 = vector.load %arg3[%c1_19, %c1_20, %c0_21] : memref<6x3x128xf32, #tpu.memory_space<vmem>>, vector<1x1x128xf32>
    %41 = vector.shape_cast %40 : vector<1x1x128xf32> to vector<1x128xf32>
    %c1_22 = arith.constant 1 : index
    %c2_23 = arith.constant 2 : index
    %c0_24 = arith.constant 0 : index
    %42 = vector.load %arg3[%c1_22, %c2_23, %c0_24] : memref<6x3x128xf32, #tpu.memory_space<vmem>>, vector<1x1x128xf32>
    %43 = vector.shape_cast %42 : vector<1x1x128xf32> to vector<1x128xf32>
    %44 = arith.truncf %37 : vector<64x128xf32> to vector<64x128xbf16>
    %c1_25 = arith.constant 1 : index
    %c0_26 = arith.constant 0 : index
    %c0_27 = arith.constant 0 : index
    %45 = vector.load %arg2[%c1_25, %c0_26, %c0_27] : memref<6x128x128xbf16, #tpu.memory_space<vmem>>, vector<1x128x128xbf16>
    %46 = vector.shape_cast %45 : vector<1x128x128xbf16> to vector<128x128xbf16>
    %cst_28 = arith.constant dense<0.000000e+00> : vector<64x128xf32>
    %47 = tpu.matmul %44, %46, %cst_28 {dimension_numbers = #tpu.dot_dimension_numbers<[1], [0], [0], [1], [0, 0, 1, 1], [], []>} : vector<64x128xbf16>, vector<128x128xbf16>, vector<64x128xf32> -> vector<64x128xf32>
    %48 = vector.broadcast %39 : vector<1x128xf32> to vector<64x128xf32>
    %49 = arith.addf %47, %48 : vector<64x128xf32>
    %50 = arith.mulf %1, %49 : vector<64x128xf32>
    %51 = arith.addf %50, %37 : vector<64x128xf32>
    %cst_29 = arith.constant dense<0.000000e+00> : vector<64xf32>
    %52 = vector.multi_reduction <add>, %51, %cst_29 [1] : vector<64x128xf32> to vector<64xf32>
    %53 = vector.shape_cast %52 : vector<64xf32> to vector<64x1xf32>
    %54 = arith.mulf %51, %51 : vector<64x128xf32>
    %cst_30 = arith.constant dense<0.000000e+00> : vector<64xf32>
    %55 = vector.multi_reduction <add>, %54, %cst_30 [1] : vector<64x128xf32> to vector<64xf32>
    %56 = vector.shape_cast %55 : vector<64xf32> to vector<64x1xf32>
    %cst_31 = arith.constant 1.250000e-02 : f32
    %57 = vector.broadcast %cst_31 : f32 to vector<64x1xf32>
    %58 = arith.mulf %53, %57 : vector<64x1xf32>
    %cst_32 = arith.constant 1.250000e-02 : f32
    %59 = vector.broadcast %cst_32 : f32 to vector<64x1xf32>
    %60 = arith.mulf %56, %59 : vector<64x1xf32>
    %61 = arith.mulf %58, %58 : vector<64x1xf32>
    %62 = arith.subf %60, %61 : vector<64x1xf32>
    %cst_33 = arith.constant 9.99999974E-6 : f32
    %63 = vector.broadcast %cst_33 : f32 to vector<64x1xf32>
    %64 = arith.addf %62, %63 : vector<64x1xf32>
    %65 = math.rsqrt %64 : vector<64x1xf32>
    %66 = vector.broadcast %58 : vector<64x1xf32> to vector<64x128xf32>
    %67 = arith.subf %51, %66 : vector<64x128xf32>
    %68 = vector.broadcast %65 : vector<64x1xf32> to vector<64x128xf32>
    %69 = arith.mulf %67, %68 : vector<64x128xf32>
    %70 = vector.broadcast %41 : vector<1x128xf32> to vector<64x128xf32>
    %71 = arith.mulf %69, %70 : vector<64x128xf32>
    %72 = vector.broadcast %43 : vector<1x128xf32> to vector<64x128xf32>
    %73 = arith.addf %71, %72 : vector<64x128xf32>
    %c2_34 = arith.constant 2 : index
    %c0_35 = arith.constant 0 : index
    %c0_36 = arith.constant 0 : index
    %74 = vector.load %arg3[%c2_34, %c0_35, %c0_36] : memref<6x3x128xf32, #tpu.memory_space<vmem>>, vector<1x1x128xf32>
    %75 = vector.shape_cast %74 : vector<1x1x128xf32> to vector<1x128xf32>
    %c2_37 = arith.constant 2 : index
    %c1_38 = arith.constant 1 : index
    %c0_39 = arith.constant 0 : index
    %76 = vector.load %arg3[%c2_37, %c1_38, %c0_39] : memref<6x3x128xf32, #tpu.memory_space<vmem>>, vector<1x1x128xf32>
    %77 = vector.shape_cast %76 : vector<1x1x128xf32> to vector<1x128xf32>
    %c2_40 = arith.constant 2 : index
    %c2_41 = arith.constant 2 : index
    %c0_42 = arith.constant 0 : index
    %78 = vector.load %arg3[%c2_40, %c2_41, %c0_42] : memref<6x3x128xf32, #tpu.memory_space<vmem>>, vector<1x1x128xf32>
    %79 = vector.shape_cast %78 : vector<1x1x128xf32> to vector<1x128xf32>
    %80 = arith.truncf %73 : vector<64x128xf32> to vector<64x128xbf16>
    %c2_43 = arith.constant 2 : index
    %c0_44 = arith.constant 0 : index
    %c0_45 = arith.constant 0 : index
    %81 = vector.load %arg2[%c2_43, %c0_44, %c0_45] : memref<6x128x128xbf16, #tpu.memory_space<vmem>>, vector<1x128x128xbf16>
    %82 = vector.shape_cast %81 : vector<1x128x128xbf16> to vector<128x128xbf16>
    %cst_46 = arith.constant dense<0.000000e+00> : vector<64x128xf32>
    %83 = tpu.matmul %80, %82, %cst_46 {dimension_numbers = #tpu.dot_dimension_numbers<[1], [0], [0], [1], [0, 0, 1, 1], [], []>} : vector<64x128xbf16>, vector<128x128xbf16>, vector<64x128xf32> -> vector<64x128xf32>
    %84 = vector.broadcast %75 : vector<1x128xf32> to vector<64x128xf32>
    %85 = arith.addf %83, %84 : vector<64x128xf32>
    %86 = arith.mulf %1, %85 : vector<64x128xf32>
    %87 = arith.addf %86, %73 : vector<64x128xf32>
    %cst_47 = arith.constant dense<0.000000e+00> : vector<64xf32>
    %88 = vector.multi_reduction <add>, %87, %cst_47 [1] : vector<64x128xf32> to vector<64xf32>
    %89 = vector.shape_cast %88 : vector<64xf32> to vector<64x1xf32>
    %90 = arith.mulf %87, %87 : vector<64x128xf32>
    %cst_48 = arith.constant dense<0.000000e+00> : vector<64xf32>
    %91 = vector.multi_reduction <add>, %90, %cst_48 [1] : vector<64x128xf32> to vector<64xf32>
    %92 = vector.shape_cast %91 : vector<64xf32> to vector<64x1xf32>
    %cst_49 = arith.constant 1.250000e-02 : f32
    %93 = vector.broadcast %cst_49 : f32 to vector<64x1xf32>
    %94 = arith.mulf %89, %93 : vector<64x1xf32>
    %cst_50 = arith.constant 1.250000e-02 : f32
    %95 = vector.broadcast %cst_50 : f32 to vector<64x1xf32>
    %96 = arith.mulf %92, %95 : vector<64x1xf32>
    %97 = arith.mulf %94, %94 : vector<64x1xf32>
    %98 = arith.subf %96, %97 : vector<64x1xf32>
    %cst_51 = arith.constant 9.99999974E-6 : f32
    %99 = vector.broadcast %cst_51 : f32 to vector<64x1xf32>
    %100 = arith.addf %98, %99 : vector<64x1xf32>
    %101 = math.rsqrt %100 : vector<64x1xf32>
    %102 = vector.broadcast %94 : vector<64x1xf32> to vector<64x128xf32>
    %103 = arith.subf %87, %102 : vector<64x128xf32>
    %104 = vector.broadcast %101 : vector<64x1xf32> to vector<64x128xf32>
    %105 = arith.mulf %103, %104 : vector<64x128xf32>
    %106 = vector.broadcast %77 : vector<1x128xf32> to vector<64x128xf32>
    %107 = arith.mulf %105, %106 : vector<64x128xf32>
    %108 = vector.broadcast %79 : vector<1x128xf32> to vector<64x128xf32>
    %109 = arith.addf %107, %108 : vector<64x128xf32>
    %c3 = arith.constant 3 : index
    %c0_52 = arith.constant 0 : index
    %c0_53 = arith.constant 0 : index
    %110 = vector.load %arg3[%c3, %c0_52, %c0_53] : memref<6x3x128xf32, #tpu.memory_space<vmem>>, vector<1x1x128xf32>
    %111 = vector.shape_cast %110 : vector<1x1x128xf32> to vector<1x128xf32>
    %c3_54 = arith.constant 3 : index
    %c1_55 = arith.constant 1 : index
    %c0_56 = arith.constant 0 : index
    %112 = vector.load %arg3[%c3_54, %c1_55, %c0_56] : memref<6x3x128xf32, #tpu.memory_space<vmem>>, vector<1x1x128xf32>
    %113 = vector.shape_cast %112 : vector<1x1x128xf32> to vector<1x128xf32>
    %c3_57 = arith.constant 3 : index
    %c2_58 = arith.constant 2 : index
    %c0_59 = arith.constant 0 : index
    %114 = vector.load %arg3[%c3_57, %c2_58, %c0_59] : memref<6x3x128xf32, #tpu.memory_space<vmem>>, vector<1x1x128xf32>
    %115 = vector.shape_cast %114 : vector<1x1x128xf32> to vector<1x128xf32>
    %116 = arith.truncf %109 : vector<64x128xf32> to vector<64x128xbf16>
    %c3_60 = arith.constant 3 : index
    %c0_61 = arith.constant 0 : index
    %c0_62 = arith.constant 0 : index
    %117 = vector.load %arg2[%c3_60, %c0_61, %c0_62] : memref<6x128x128xbf16, #tpu.memory_space<vmem>>, vector<1x128x128xbf16>
    %118 = vector.shape_cast %117 : vector<1x128x128xbf16> to vector<128x128xbf16>
    %cst_63 = arith.constant dense<0.000000e+00> : vector<64x128xf32>
    %119 = tpu.matmul %116, %118, %cst_63 {dimension_numbers = #tpu.dot_dimension_numbers<[1], [0], [0], [1], [0, 0, 1, 1], [], []>} : vector<64x128xbf16>, vector<128x128xbf16>, vector<64x128xf32> -> vector<64x128xf32>
    %120 = vector.broadcast %111 : vector<1x128xf32> to vector<64x128xf32>
    %121 = arith.addf %119, %120 : vector<64x128xf32>
    %122 = arith.mulf %1, %121 : vector<64x128xf32>
    %123 = arith.addf %122, %109 : vector<64x128xf32>
    %cst_64 = arith.constant dense<0.000000e+00> : vector<64xf32>
    %124 = vector.multi_reduction <add>, %123, %cst_64 [1] : vector<64x128xf32> to vector<64xf32>
    %125 = vector.shape_cast %124 : vector<64xf32> to vector<64x1xf32>
    %126 = arith.mulf %123, %123 : vector<64x128xf32>
    %cst_65 = arith.constant dense<0.000000e+00> : vector<64xf32>
    %127 = vector.multi_reduction <add>, %126, %cst_65 [1] : vector<64x128xf32> to vector<64xf32>
    %128 = vector.shape_cast %127 : vector<64xf32> to vector<64x1xf32>
    %cst_66 = arith.constant 1.250000e-02 : f32
    %129 = vector.broadcast %cst_66 : f32 to vector<64x1xf32>
    %130 = arith.mulf %125, %129 : vector<64x1xf32>
    %cst_67 = arith.constant 1.250000e-02 : f32
    %131 = vector.broadcast %cst_67 : f32 to vector<64x1xf32>
    %132 = arith.mulf %128, %131 : vector<64x1xf32>
    %133 = arith.mulf %130, %130 : vector<64x1xf32>
    %134 = arith.subf %132, %133 : vector<64x1xf32>
    %cst_68 = arith.constant 9.99999974E-6 : f32
    %135 = vector.broadcast %cst_68 : f32 to vector<64x1xf32>
    %136 = arith.addf %134, %135 : vector<64x1xf32>
    %137 = math.rsqrt %136 : vector<64x1xf32>
    %138 = vector.broadcast %130 : vector<64x1xf32> to vector<64x128xf32>
    %139 = arith.subf %123, %138 : vector<64x128xf32>
    %140 = vector.broadcast %137 : vector<64x1xf32> to vector<64x128xf32>
    %141 = arith.mulf %139, %140 : vector<64x128xf32>
    %142 = vector.broadcast %113 : vector<1x128xf32> to vector<64x128xf32>
    %143 = arith.mulf %141, %142 : vector<64x128xf32>
    %144 = vector.broadcast %115 : vector<1x128xf32> to vector<64x128xf32>
    %145 = arith.addf %143, %144 : vector<64x128xf32>
    %c4 = arith.constant 4 : index
    %c0_69 = arith.constant 0 : index
    %c0_70 = arith.constant 0 : index
    %146 = vector.load %arg3[%c4, %c0_69, %c0_70] : memref<6x3x128xf32, #tpu.memory_space<vmem>>, vector<1x1x128xf32>
    %147 = vector.shape_cast %146 : vector<1x1x128xf32> to vector<1x128xf32>
    %c4_71 = arith.constant 4 : index
    %c1_72 = arith.constant 1 : index
    %c0_73 = arith.constant 0 : index
    %148 = vector.load %arg3[%c4_71, %c1_72, %c0_73] : memref<6x3x128xf32, #tpu.memory_space<vmem>>, vector<1x1x128xf32>
    %149 = vector.shape_cast %148 : vector<1x1x128xf32> to vector<1x128xf32>
    %c4_74 = arith.constant 4 : index
    %c2_75 = arith.constant 2 : index
    %c0_76 = arith.constant 0 : index
    %150 = vector.load %arg3[%c4_74, %c2_75, %c0_76] : memref<6x3x128xf32, #tpu.memory_space<vmem>>, vector<1x1x128xf32>
    %151 = vector.shape_cast %150 : vector<1x1x128xf32> to vector<1x128xf32>
    %152 = arith.truncf %145 : vector<64x128xf32> to vector<64x128xbf16>
    %c4_77 = arith.constant 4 : index
    %c0_78 = arith.constant 0 : index
    %c0_79 = arith.constant 0 : index
    %153 = vector.load %arg2[%c4_77, %c0_78, %c0_79] : memref<6x128x128xbf16, #tpu.memory_space<vmem>>, vector<1x128x128xbf16>
    %154 = vector.shape_cast %153 : vector<1x128x128xbf16> to vector<128x128xbf16>
    %cst_80 = arith.constant dense<0.000000e+00> : vector<64x128xf32>
    %155 = tpu.matmul %152, %154, %cst_80 {dimension_numbers = #tpu.dot_dimension_numbers<[1], [0], [0], [1], [0, 0, 1, 1], [], []>} : vector<64x128xbf16>, vector<128x128xbf16>, vector<64x128xf32> -> vector<64x128xf32>
    %156 = vector.broadcast %147 : vector<1x128xf32> to vector<64x128xf32>
    %157 = arith.addf %155, %156 : vector<64x128xf32>
    %158 = arith.mulf %1, %157 : vector<64x128xf32>
    %159 = arith.addf %158, %145 : vector<64x128xf32>
    %cst_81 = arith.constant dense<0.000000e+00> : vector<64xf32>
    %160 = vector.multi_reduction <add>, %159, %cst_81 [1] : vector<64x128xf32> to vector<64xf32>
    %161 = vector.shape_cast %160 : vector<64xf32> to vector<64x1xf32>
    %162 = arith.mulf %159, %159 : vector<64x128xf32>
    %cst_82 = arith.constant dense<0.000000e+00> : vector<64xf32>
    %163 = vector.multi_reduction <add>, %162, %cst_82 [1] : vector<64x128xf32> to vector<64xf32>
    %164 = vector.shape_cast %163 : vector<64xf32> to vector<64x1xf32>
    %cst_83 = arith.constant 1.250000e-02 : f32
    %165 = vector.broadcast %cst_83 : f32 to vector<64x1xf32>
    %166 = arith.mulf %161, %165 : vector<64x1xf32>
    %cst_84 = arith.constant 1.250000e-02 : f32
    %167 = vector.broadcast %cst_84 : f32 to vector<64x1xf32>
    %168 = arith.mulf %164, %167 : vector<64x1xf32>
    %169 = arith.mulf %166, %166 : vector<64x1xf32>
    %170 = arith.subf %168, %169 : vector<64x1xf32>
    %cst_85 = arith.constant 9.99999974E-6 : f32
    %171 = vector.broadcast %cst_85 : f32 to vector<64x1xf32>
    %172 = arith.addf %170, %171 : vector<64x1xf32>
    %173 = math.rsqrt %172 : vector<64x1xf32>
    %174 = vector.broadcast %166 : vector<64x1xf32> to vector<64x128xf32>
    %175 = arith.subf %159, %174 : vector<64x128xf32>
    %176 = vector.broadcast %173 : vector<64x1xf32> to vector<64x128xf32>
    %177 = arith.mulf %175, %176 : vector<64x128xf32>
    %178 = vector.broadcast %149 : vector<1x128xf32> to vector<64x128xf32>
    %179 = arith.mulf %177, %178 : vector<64x128xf32>
    %180 = vector.broadcast %151 : vector<1x128xf32> to vector<64x128xf32>
    %181 = arith.addf %179, %180 : vector<64x128xf32>
    %c5 = arith.constant 5 : index
    %c0_86 = arith.constant 0 : index
    %c0_87 = arith.constant 0 : index
    %182 = vector.load %arg3[%c5, %c0_86, %c0_87] : memref<6x3x128xf32, #tpu.memory_space<vmem>>, vector<1x1x128xf32>
    %183 = vector.shape_cast %182 : vector<1x1x128xf32> to vector<1x128xf32>
    %c5_88 = arith.constant 5 : index
    %c1_89 = arith.constant 1 : index
    %c0_90 = arith.constant 0 : index
    %184 = vector.load %arg3[%c5_88, %c1_89, %c0_90] : memref<6x3x128xf32, #tpu.memory_space<vmem>>, vector<1x1x128xf32>
    %185 = vector.shape_cast %184 : vector<1x1x128xf32> to vector<1x128xf32>
    %c5_91 = arith.constant 5 : index
    %c2_92 = arith.constant 2 : index
    %c0_93 = arith.constant 0 : index
    %186 = vector.load %arg3[%c5_91, %c2_92, %c0_93] : memref<6x3x128xf32, #tpu.memory_space<vmem>>, vector<1x1x128xf32>
    %187 = vector.shape_cast %186 : vector<1x1x128xf32> to vector<1x128xf32>
    %188 = arith.truncf %181 : vector<64x128xf32> to vector<64x128xbf16>
    %c5_94 = arith.constant 5 : index
    %c0_95 = arith.constant 0 : index
    %c0_96 = arith.constant 0 : index
    %189 = vector.load %arg2[%c5_94, %c0_95, %c0_96] : memref<6x128x128xbf16, #tpu.memory_space<vmem>>, vector<1x128x128xbf16>
    %190 = vector.shape_cast %189 : vector<1x128x128xbf16> to vector<128x128xbf16>
    %cst_97 = arith.constant dense<0.000000e+00> : vector<64x128xf32>
    %191 = tpu.matmul %188, %190, %cst_97 {dimension_numbers = #tpu.dot_dimension_numbers<[1], [0], [0], [1], [0, 0, 1, 1], [], []>} : vector<64x128xbf16>, vector<128x128xbf16>, vector<64x128xf32> -> vector<64x128xf32>
    %192 = vector.broadcast %183 : vector<1x128xf32> to vector<64x128xf32>
    %193 = arith.addf %191, %192 : vector<64x128xf32>
    %194 = arith.mulf %1, %193 : vector<64x128xf32>
    %195 = arith.addf %194, %181 : vector<64x128xf32>
    %cst_98 = arith.constant dense<0.000000e+00> : vector<64xf32>
    %196 = vector.multi_reduction <add>, %195, %cst_98 [1] : vector<64x128xf32> to vector<64xf32>
    %197 = vector.shape_cast %196 : vector<64xf32> to vector<64x1xf32>
    %198 = arith.mulf %195, %195 : vector<64x128xf32>
    %cst_99 = arith.constant dense<0.000000e+00> : vector<64xf32>
    %199 = vector.multi_reduction <add>, %198, %cst_99 [1] : vector<64x128xf32> to vector<64xf32>
    %200 = vector.shape_cast %199 : vector<64xf32> to vector<64x1xf32>
    %cst_100 = arith.constant 1.250000e-02 : f32
    %201 = vector.broadcast %cst_100 : f32 to vector<64x1xf32>
    %202 = arith.mulf %197, %201 : vector<64x1xf32>
    %cst_101 = arith.constant 1.250000e-02 : f32
    %203 = vector.broadcast %cst_101 : f32 to vector<64x1xf32>
    %204 = arith.mulf %200, %203 : vector<64x1xf32>
    %205 = arith.mulf %202, %202 : vector<64x1xf32>
    %206 = arith.subf %204, %205 : vector<64x1xf32>
    %cst_102 = arith.constant 9.99999974E-6 : f32
    %207 = vector.broadcast %cst_102 : f32 to vector<64x1xf32>
    %208 = arith.addf %206, %207 : vector<64x1xf32>
    %209 = math.rsqrt %208 : vector<64x1xf32>
    %210 = vector.broadcast %202 : vector<64x1xf32> to vector<64x128xf32>
    %211 = arith.subf %195, %210 : vector<64x128xf32>
    %212 = vector.broadcast %209 : vector<64x1xf32> to vector<64x128xf32>
    %213 = arith.mulf %211, %212 : vector<64x128xf32>
    %214 = vector.broadcast %185 : vector<1x128xf32> to vector<64x128xf32>
    %215 = arith.mulf %213, %214 : vector<64x128xf32>
    %216 = vector.broadcast %187 : vector<1x128xf32> to vector<64x128xf32>
    %217 = arith.addf %215, %216 : vector<64x128xf32>
    %c0_103 = arith.constant 0 : index
    %c0_104 = arith.constant 0 : index
    %218 = vector.load %arg6[%c0_103, %c0_104] : memref<4x128xf32, #tpu.memory_space<vmem>>, vector<1x128xf32>
    %c1_105 = arith.constant 1 : index
    %c0_106 = arith.constant 0 : index
    %219 = vector.load %arg6[%c1_105, %c0_106] : memref<4x128xf32, #tpu.memory_space<vmem>>, vector<1x128xf32>
    %c2_107 = arith.constant 2 : index
    %c0_108 = arith.constant 0 : index
    %220 = vector.load %arg6[%c2_107, %c0_108] : memref<4x128xf32, #tpu.memory_space<vmem>>, vector<1x128xf32>
    %c3_109 = arith.constant 3 : index
    %c0_110 = arith.constant 0 : index
    %221 = vector.load %arg6[%c3_109, %c0_110] : memref<4x128xf32, #tpu.memory_space<vmem>>, vector<1x1xf32>
    %222 = arith.truncf %217 : vector<64x128xf32> to vector<64x128xbf16>
    %c0_111 = arith.constant 0 : index
    %c0_112 = arith.constant 0 : index
    %223 = vector.load %arg4[%c0_111, %c0_112] : memref<128x128xbf16, #tpu.memory_space<vmem>>, vector<128x128xbf16>
    %cst_113 = arith.constant dense<0.000000e+00> : vector<64x128xf32>
    %224 = tpu.matmul %222, %223, %cst_113 {dimension_numbers = #tpu.dot_dimension_numbers<[1], [0], [0], [1], [0, 0, 1, 1], [], []>} : vector<64x128xbf16>, vector<128x128xbf16>, vector<64x128xf32> -> vector<64x128xf32>
    %225 = vector.broadcast %218 : vector<1x128xf32> to vector<64x128xf32>
    %226 = arith.addf %224, %225 : vector<64x128xf32>
    %cst_114 = arith.constant 0.000000e+00 : f32
    %227 = vector.broadcast %cst_114 : f32 to vector<64x128xf32>
    %228 = arith.maximumf %226, %227 : vector<64x128xf32>
    %229 = arith.truncf %228 : vector<64x128xf32> to vector<64x128xbf16>
    %c0_115 = arith.constant 0 : index
    %c0_116 = arith.constant 0 : index
    %230 = vector.load %arg5[%c0_115, %c0_116] : memref<128x128xbf16, #tpu.memory_space<vmem>>, vector<128x128xbf16>
    %cst_117 = arith.constant dense<0.000000e+00> : vector<64x128xf32>
    %231 = tpu.matmul %229, %230, %cst_117 {dimension_numbers = #tpu.dot_dimension_numbers<[1], [0], [0], [1], [0, 0, 1, 1], [], []>} : vector<64x128xbf16>, vector<128x128xbf16>, vector<64x128xf32> -> vector<64x128xf32>
    %232 = vector.broadcast %219 : vector<1x128xf32> to vector<64x128xf32>
    %233 = arith.addf %231, %232 : vector<64x128xf32>
    %cst_118 = arith.constant 0.000000e+00 : f32
    %234 = vector.broadcast %cst_118 : f32 to vector<64x128xf32>
    %235 = arith.maximumf %233, %234 : vector<64x128xf32>
    %236 = vector.broadcast %220 : vector<1x128xf32> to vector<64x128xf32>
    %237 = arith.mulf %235, %236 : vector<64x128xf32>
    %cst_119 = arith.constant dense<0.000000e+00> : vector<64xf32>
    %238 = vector.multi_reduction <add>, %237, %cst_119 [1] : vector<64x128xf32> to vector<64xf32>
    %239 = vector.shape_cast %238 : vector<64xf32> to vector<64x1xf32>
    %240 = vector.broadcast %221 : vector<1x1xf32> to vector<64x1xf32>
    %241 = arith.addf %239, %240 : vector<64x1xf32>
    %c0_120 = arith.constant 0 : index
    %c0_121 = arith.constant 0 : index
    %242 = vector.load %arg7[%c0_120, %c0_121] : memref<64x1xf32, #tpu.memory_space<vmem>>, vector<64x1xf32>
    tpu.vector_store %arg7[%c0_120, %c0_121], %241 {strides = array<i32>} : memref<64x1xf32, #tpu.memory_space<vmem>>, vector<64x1xf32>,
    return
  }
  func.func @transform_0(%arg0: i32) -> (i32, i32) {
    %c0_i32 = arith.constant 0 : i32
    %c0_i32_0 = arith.constant 0 : i32
    return %arg0, %c0_i32 : i32, i32
  }
  func.func @transform_1(%arg0: i32) -> (i32, i32, i32) {
    %c0_i32 = arith.constant 0 : i32
    %c0_i32_0 = arith.constant 0 : i32
    %c0_i32_1 = arith.constant 0 : i32
    %c0_i32_2 = arith.constant 0 : i32
    return %c0_i32, %c0_i32_0, %c0_i32_1 : i32, i32, i32
  }
  func.func @transform_2(%arg0: i32) -> (i32, i32, i32) {
    %c0_i32 = arith.constant 0 : i32
    %c0_i32_0 = arith.constant 0 : i32
    %c0_i32_1 = arith.constant 0 : i32
    %c0_i32_2 = arith.constant 0 : i32
    return %c0_i32, %c0_i32_0, %c0_i32_1 : i32, i32, i32
  }
  func.func @transform_3(%arg0: i32) -> (i32, i32) {
    %c0_i32 = arith.constant 0 : i32
    %c0_i32_0 = arith.constant 0 : i32
    %c0_i32_1 = arith.constant 0 : i32
    return %c0_i32, %c0_i32_0 : i32, i32
  }
  func.func @transform_4(%arg0: i32) -> (i32, i32) {
    %c0_i32 = arith.constant 0 : i32
    %c0_i32_0 = arith.constant 0 : i32
    %c0_i32_1 = arith.constant 0 : i32
    return %c0_i32, %c0_i32_0 : i32, i32
  }
  func.func @transform_5(%arg0: i32) -> (i32, i32) {
    %c0_i32 = arith.constant 0 : i32
    %c0_i32_0 = arith.constant 0 : i32
    %c0_i32_1 = arith.constant 0 : i32
    return %c0_i32, %c0_i32_0 : i32, i32
  }
  func.func @transform_6(%arg0: i32) -> (i32, i32) {
    %c0_i32 = arith.constant 0 : i32
    %c0_i32_0 = arith.constant 0 : i32
    return %arg0, %c0_i32 : i32, i32
  }
}

</mosaic_0001>

<llo_original>
// kernel: tpu_custom_call.1
$region0: #{tpu_custom_call.1}
  #allocation0 [shape = 'u32[]', space=smem, size = 0x4, offset = 0x4, fixed_abs, tag = 'smem constant byte address 0x4 - core index']
  #allocation1 [shape = 'u32[144,128]{1,0:T(1,128)}', space=vmem, size = 0x12000, scoped, tag = 'internal scratch']
  %s0 = inlined_call_operand.hbm [shape: bf16[128,128], index: 0, kind: input, shape index: {}]
  %s1 = inlined_call_operand.hbm [shape: bf16[6,128,128], index: 1, kind: input, shape index: {}]
  %s2 = inlined_call_operand.hbm [shape: f32[6,3,128], index: 2, kind: input, shape index: {}]
  %s3 = inlined_call_operand.hbm [shape: bf16[128,128], index: 3, kind: input, shape index: {}]
  %s4 = inlined_call_operand.hbm [shape: bf16[128,128], index: 4, kind: input, shape index: {}]
  %s5 = inlined_call_operand.vmem [shape: f32[4,128], index: 5, kind: input, shape index: {}]
  %s6 = inlined_call_operand.vmem [shape: f32[128,1], index: 6, kind: output, shape index: {}]
  %s7 = sld [smem:[#allocation0]]
  $region77: #{tpu_custom_call.1} parent=0
    _
  %s9 = ssub.s32 1, %s7
  %s10 = scalar_select 0, %s9, %s7
  $region1: #{tpu_custom_call.1} parent=0
    #allocation2 [shape = 'u8[32768]{0}', space=vmem, size = 0x8000, scoped, tag = 'input window, operand 0']
    #allocation3 [shape = 's32[2]{0}', space=sflag, size = 0x8, scoped, tag = 'scoped memory for tpu_custom_call.1']
    #allocation4 [shape = 'u8[196608]{0}', space=vmem, size = 0x30000, scoped, tag = 'input window, operand 1, single buffered']
    #allocation5 [shape = 's32[1]{0}', space=sflag, size = 0x4, scoped, tag = 'scoped memory for tpu_custom_call.1']
    #allocation6 [shape = 'u8[12288]{0}', space=vmem, size = 0x3000, scoped, tag = 'input window, operand 2, single buffered']
    #allocation7 [shape = 'u8[32768]{0}', space=vmem, size = 0x8000, scoped, tag = 'input window, operand 3, single buffered']
    #allocation8 [shape = 's32[1]{0}', space=sflag, size = 0x4, scoped, tag = 'scoped memory for tpu_custom_call.1']
    #allocation9 [shape = 'u8[32768]{0}', space=vmem, size = 0x8000, scoped, tag = 'input window, operand 4, single buffered']
    %11 = vsyncpa [#allocation3], 0
    %s12 = scalar_lea.sflag [#allocation3], 1
    %13 = vsyncpa %s12, 0
    %14 = vsyncpa [#allocation5], 0
    %15 = vsyncpa [#allocation8], 0
    loop: start=0, step=1, limit=4
    $region2: #{tpu_custom_call.1} parent=1 // loop_pre_header
      _
    $region3: #{tpu_custom_call.1} parent=1 // loop_header
      %s17 = sphi 0, %s21
      %p18 = scmp.ge.s32.totalorder %s17, 4
      %s27 = sphi 0, %s29
      %s30 = sphi 0, %s27
      %s31 = sphi 0, %s30
      %s47 = sphi 0, %s31
      %s51 = sphi 0, %s51
      %s53 = sphi 0, %s51
      %s54 = sphi 0, %s53
      %s68 = sphi 0, %s54
      %s72 = sphi 0, %s72
      %s74 = sphi 0, %s72
      %s75 = sphi 0, %s74
      %s89 = sphi 0, %s75
      %s93 = sphi 0, %s93
      %s95 = sphi 0, %s93
      %s96 = sphi 0, %s95
      %s110 = sphi 0, %s96
      %s114 = sphi 0, %s114
      %s116 = sphi 0, %s114
      %s117 = sphi 0, %s116
      %s131 = sphi 0, %s117
      %s135 = sphi 0, %s135
      %s137 = sphi 0, %s135
      %s138 = sphi 0, %s137
      %s152 = sphi 0, %s138
      %s158 = sphi 0, %s160
      %s161 = sphi 0, %s158
      %s162 = sphi 0, %s161
      %s178 = sphi 0, %s162
    $region4: #{tpu_custom_call.1} parent=1 // loop_header_branch
      %20 = sbr.rel (%p18) target = $region8
    $region5: #{tpu_custom_call.1} parent=1 // loop_body
      %s22 = ssub.s32 %s17, 1
      %s23 = ssub.s32 %s17, 2
      %s24 = sadd.s32 %s17, 1
      %s25 = ssub.s32 %s17, %s24
      %p26 = scmp.eq.s32.totalorder %s25, 0
      %s28 = sadd.s32 %s27, 1
      %s29 = scalar_select %p26, %s27, %s28
      %p32 = pneg %p26
      %p33 = scmp.eq.s32.totalorder %s17, 1
      %p34 = por %p32, %p33
      %p35 = scmp.ne.s32.totalorder %s27, %s30
      %p36 = scmp.eq.s32.totalorder %s17, 0
      %p37 = por %p35, %p36
      %p38 = scmp.ne.s32.totalorder %s27, %s30
      %p39 = scmp.eq.s32.totalorder %s22, 1
      %p40 = por %p38, %p39
      %p41 = scmp.ne.s32.totalorder %s30, %s31
      %p42 = scmp.eq.s32.totalorder %s22, 0
      %p43 = por %p41, %p42
      %p44 = scmp.ne.s32.totalorder %s30, %s31
      %p45 = scmp.eq.s32.totalorder %s23, 1
      %p46 = por %p44, %p45
      %p48 = scmp.ne.s32.totalorder %s31, %s47
      %p49 = scmp.eq.s32.totalorder %s23, 0
      %p50 = por %p48, %p49
      %s52 = sadd.s32 %s51, 1
      %p55 = scmp.eq.s32.totalorder %s17, 1
      %p56 = scmp.ne.s32.totalorder %s51, %s53
      %p57 = scmp.eq.s32.totalorder %s17, 0
      %p58 = por %p56, %p57
      %p59 = scmp.ne.s32.totalorder %s51, %s53
      %p60 = scmp.eq.s32.totalorder %s22, 1
      %p61 = por %p59, %p60
      %p62 = scmp.ne.s32.totalorder %s53, %s54
      %p63 = scmp.eq.s32.totalorder %s22, 0
      %p64 = por %p62, %p63
      %p65 = scmp.ne.s32.totalorder %s53, %s54
      %p66 = scmp.eq.s32.totalorder %s23, 1
      %p67 = por %p65, %p66
      %p69 = scmp.ne.s32.totalorder %s54, %s68
      %p70 = scmp.eq.s32.totalorder %s23, 0
      %p71 = por %p69, %p70
      %s73 = sadd.s32 %s72, 1
      %p76 = scmp.eq.s32.totalorder %s17, 1
      %p77 = scmp.ne.s32.totalorder %s72, %s74
      %p78 = scmp.eq.s32.totalorder %s17, 0
      %p79 = por %p77, %p78
      %p80 = scmp.ne.s32.totalorder %s72, %s74
      %p81 = scmp.eq.s32.totalorder %s22, 1
      %p82 = por %p80, %p81
      %p83 = scmp.ne.s32.totalorder %s74, %s75
      %p84 = scmp.eq.s32.totalorder %s22, 0
      %p85 = por %p83, %p84
      %p86 = scmp.ne.s32.totalorder %s74, %s75
      %p87 = scmp.eq.s32.totalorder %s23, 1
      %p88 = por %p86, %p87
      %p90 = scmp.ne.s32.totalorder %s75, %s89
      %p91 = scmp.eq.s32.totalorder %s23, 0
      %p92 = por %p90, %p91
      %s94 = sadd.s32 %s93, 1
      %p97 = scmp.eq.s32.totalorder %s17, 1
      %p98 = scmp.ne.s32.totalorder %s93, %s95
      %p99 = scmp.eq.s32.totalorder %s17, 0
      %p100 = por %p98, %p99
      %p101 = scmp.ne.s32.totalorder %s93, %s95
      %p102 = scmp.eq.s32.totalorder %s22, 1
      %p103 = por %p101, %p102
      %p104 = scmp.ne.s32.totalorder %s95, %s96
      %p105 = scmp.eq.s32.totalorder %s22, 0
      %p106 = por %p104, %p105
      %p107 = scmp.ne.s32.totalorder %s95, %s96
      %p108 = scmp.eq.s32.totalorder %s23, 1
      %p109 = por %p107, %p108
      %p111 = scmp.ne.s32.totalorder %s96, %s110
      %p112 = scmp.eq.s32.totalorder %s23, 0
      %p113 = por %p111, %p112
      %s115 = sadd.s32 %s114, 1
      %p118 = scmp.eq.s32.totalorder %s17, 1
      %p119 = scmp.ne.s32.totalorder %s114, %s116
      %p120 = scmp.eq.s32.totalorder %s17, 0
      %p121 = por %p119, %p120
      %p122 = scmp.ne.s32.totalorder %s114, %s116
      %p123 = scmp.eq.s32.totalorder %s22, 1
      %p124 = por %p122, %p123
      %p125 = scmp.ne.s32.totalorder %s116, %s117
      %p126 = scmp.eq.s32.totalorder %s22, 0
      %p127 = por %p125, %p126
      %p128 = scmp.ne.s32.totalorder %s116, %s117
      %p129 = scmp.eq.s32.totalorder %s23, 1
      %p130 = por %p128, %p129
      %p132 = scmp.ne.s32.totalorder %s117, %s131
      %p133 = scmp.eq.s32.totalorder %s23, 0
      %p134 = por %p132, %p133
      %s136 = sadd.s32 %s135, 1
      %p139 = scmp.eq.s32.totalorder %s17, 1
      %p140 = scmp.ne.s32.totalorder %s135, %s137
      %p141 = scmp.eq.s32.totalorder %s17, 0
      %p142 = por %p140, %p141
      %p143 = scmp.ne.s32.totalorder %s135, %s137
      %p144 = scmp.eq.s32.totalorder %s22, 1
      %p145 = por %p143, %p144
      %p146 = scmp.ne.s32.totalorder %s137, %s138
      %p147 = scmp.eq.s32.totalorder %s22, 0
      %p148 = por %p146, %p147
      %p149 = scmp.ne.s32.totalorder %s137, %s138
      %p150 = scmp.eq.s32.totalorder %s23, 1
      %p151 = por %p149, %p150
      %p153 = scmp.ne.s32.totalorder %s138, %s152
      %p154 = scmp.eq.s32.totalorder %s23, 0
      %p155 = por %p153, %p154
      %s156 = ssub.s32 %s17, %s24
      %p157 = scmp.eq.s32.totalorder %s156, 0
      %s159 = sadd.s32 %s158, 1
      %s160 = scalar_select %p157, %s158, %s159
      %p163 = pneg %p157
      %p164 = scmp.eq.s32.totalorder %s17, 1
      %p165 = por %p163, %p164
      %p166 = scmp.ne.s32.totalorder %s158, %s161
      %p167 = scmp.eq.s32.totalorder %s17, 0
      %p168 = por %p166, %p167
      %p169 = scmp.ne.s32.totalorder %s158, %s161
      %p170 = scmp.eq.s32.totalorder %s22, 1
      %p171 = por %p169, %p170
      %p172 = scmp.ne.s32.totalorder %s161, %s162
      %p173 = scmp.eq.s32.totalorder %s22, 0
      %p174 = por %p172, %p173
      %p175 = scmp.ne.s32.totalorder %s161, %s162
      %p176 = scmp.eq.s32.totalorder %s23, 1
      %p177 = por %p175, %p176
      %p179 = scmp.ne.s32.totalorder %s162, %s178
      %p180 = scmp.eq.s32.totalorder %s23, 0
      %p181 = por %p179, %p180
      %p182 = scmp.le.s32.totalorder 1, %s17
      %p183 = scmp.lt.s32.totalorder %s17, 3
      %p184 = pnand %p182, %p183
      %p185 = pneg %p184
      // Predicated region
      $region9: #{tpu_custom_call.1} parent=5 // pred_check
        _
      $region10: #{tpu_custom_call.1} parent=5 // pred_check_branch
        %187 = sbr.rel (%p184) target = $region12
      $region11: #{tpu_custom_call.1} parent=5 // pred_region
        %s188 = ssub.s32 %s17, 1
        // Predicated region
        $region13: #{tpu_custom_call.1} parent=11 // pred_check
          %p189 = pneg %p64
        $region14: #{tpu_custom_call.1} parent=11 // pred_check_branch
          %191 = sbr.rel (%p189) target = $region16
        $region15: #{tpu_custom_call.1} parent=11 // pred_region
          %s193 = ssub.s32 6144, 6144
          %194 = vsyncadd [#allocation5], %s193
          %s195 = sshll.u32 [#allocation4], 4
          %s196 = int_to_ptr.vmem [resolvable:$true] %s195
          %201 = dma.hbm_to_vmem [thread:$0]  %s1, 6144, %s196, [#allocation5], 64, 64, 4
        $region16: #{tpu_custom_call.1} parent=11 // pred_fallthru
          _
        // Predicated region
        $region17: #{tpu_custom_call.1} parent=11 // pred_check
          %p202 = pneg %p85
        $region18: #{tpu_custom_call.1} parent=11 // pred_check_branch
          %204 = sbr.rel (%p202) target = $region20
        $region19: #{tpu_custom_call.1} parent=11 // pred_region
          %s206 = ssub.s32 384, 384
          %207 = vsyncadd [#allocation5], %s206
          %s208 = sshll.u32 [#allocation6], 4
          %s209 = int_to_ptr.vmem [resolvable:$true] %s208
          %214 = dma.hbm_to_vmem [thread:$0]  %s2, 384, %s209, [#allocation5], 64, 64, 4
        $region20: #{tpu_custom_call.1} parent=11 // pred_fallthru
          _
        // Predicated region
        $region21: #{tpu_custom_call.1} parent=11 // pred_check
          %p215 = pneg %p106
        $region22: #{tpu_custom_call.1} parent=11 // pred_check_branch
          %217 = sbr.rel (%p215) target = $region24
        $region23: #{tpu_custom_call.1} parent=11 // pred_region
          %s219 = ssub.s32 1024, 1024
          %220 = vsyncadd [#allocation8], %s219
          %s221 = sshll.u32 [#allocation7], 4
          %s222 = int_to_ptr.vmem [resolvable:$true] %s221
          %227 = dma.hbm_to_vmem [thread:$0]  %s3, 1024, %s222, [#allocation8], 64, 64, 4
        $region24: #{tpu_custom_call.1} parent=11 // pred_fallthru
          _
        // Predicated region
        $region25: #{tpu_custom_call.1} parent=11 // pred_check
          %p228 = pneg %p127
        $region26: #{tpu_custom_call.1} parent=11 // pred_check_branch
          %230 = sbr.rel (%p228) target = $region28
        $region27: #{tpu_custom_call.1} parent=11 // pred_region
          %s232 = ssub.s32 1024, 1024
          %233 = vsyncadd [#allocation8], %s232
          %s234 = sshll.u32 [#allocation9], 4
          %s235 = int_to_ptr.vmem [resolvable:$true] %s234
          %240 = dma.hbm_to_vmem [thread:$0]  %s4, 1024, %s235, [#allocation8], 64, 64, 4
        $region28: #{tpu_custom_call.1} parent=11 // pred_fallthru
          _
        // Predicated region
        $region29: #{tpu_custom_call.1} parent=11 // pred_check
          %p241 = pneg %p148
        $region30: #{tpu_custom_call.1} parent=11 // pred_check_branch
          %243 = sbr.rel (%p241) target = $region32
        $region31: #{tpu_custom_call.1} parent=11 // pred_region
          _
        $region32: #{tpu_custom_call.1} parent=11 // pred_fallthru
          _
      $region12: #{tpu_custom_call.1} parent=5 // pred_fallthru
        _
      %p244 = scmp.lt.s32.totalorder %s17, 2
      // Predicated region
      $region33: #{tpu_custom_call.1} parent=5 // pred_check
        %p245 = pneg %p244
      $region34: #{tpu_custom_call.1} parent=5 // pred_check_branch
        %247 = sbr.rel (%p245) target = $region36
      $region35: #{tpu_custom_call.1} parent=5 // pred_region
        // Predicated region
        $region37: #{tpu_custom_call.1} parent=35 // pred_check
          %p248 = pneg %p37
        $region38: #{tpu_custom_call.1} parent=35 // pred_check_branch
          %250 = sbr.rel (%p248) target = $region40
        $region39: #{tpu_custom_call.1} parent=35 // pred_region
          %s251 = sand.u32 %s27, 1
          %s252 = scalar_lea.sflag [#allocation3], %s251
          %s253 = sand.u32 %s27, 1
          %s254 = smul.addr %s253, 32
          %s255 = scalar_lea.vmem [#allocation2], %s254
          %s256 = smul.u32 8, %s17
          %s258 = ssub.s32 512, 512
          %259 = vsyncadd %s252, %s258
          %s260 = smul.addr %s256, 64
          %s261 = scalar_lea.hbm %s0, %s260
          %s262 = sshll.u32 %s255, 4
          %s263 = int_to_ptr.vmem [resolvable:$true] %s262
          %268 = dma.hbm_to_vmem [thread:$0]  %s261, 512, %s263, %s252, 64, 64, 4
        $region40: #{tpu_custom_call.1} parent=35 // pred_fallthru
          _
      $region36: #{tpu_custom_call.1} parent=5 // pred_fallthru
        _
      %p269 = scmp.le.s32.totalorder 1, %s17
      %p270 = scmp.lt.s32.totalorder %s17, 3
      %p271 = pnand %p269, %p270
      %p272 = pneg %p271
      // Predicated region
      $region41: #{tpu_custom_call.1} parent=5 // pred_check
        _
      $region42: #{tpu_custom_call.1} parent=5 // pred_check_branch
        %274 = sbr.rel (%p271) target = $region44
      $region43: #{tpu_custom_call.1} parent=5 // pred_region
        %s275 = ssub.s32 %s17, 1
        %s276 = sand.u32 %s30, 1
        %s277 = scalar_lea.sflag [#allocation3], %s276
        %s278 = sand.u32 %s30, 1
        %s279 = smul.addr %s278, 32
        %s280 = scalar_lea.vmem [#allocation2], %s279
        // Predicated region
        $region45: #{tpu_custom_call.1} parent=43 // pred_check
          %p281 = pneg %p43
        $region46: #{tpu_custom_call.1} parent=43 // pred_check_branch
          %283 = sbr.rel (%p281) target = $region48
        $region47: #{tpu_custom_call.1} parent=43 // pred_region
          %284 = dma.done %s277, 512
        $region48: #{tpu_custom_call.1} parent=43 // pred_fallthru
          _
        // Predicated region
        $region49: #{tpu_custom_call.1} parent=43 // pred_check
          %p285 = pneg %p64
        $region50: #{tpu_custom_call.1} parent=43 // pred_check_branch
          %287 = sbr.rel (%p285) target = $region52
        $region51: #{tpu_custom_call.1} parent=43 // pred_region
          %288 = dma.done [#allocation5], 6144
        $region52: #{tpu_custom_call.1} parent=43 // pred_fallthru
          _
        // Predicated region
        $region53: #{tpu_custom_call.1} parent=43 // pred_check
          %p289 = pneg %p85
        $region54: #{tpu_custom_call.1} parent=43 // pred_check_branch
          %291 = sbr.rel (%p289) target = $region56
        $region55: #{tpu_custom_call.1} parent=43 // pred_region
          %292 = dma.done [#allocation5], 384
        $region56: #{tpu_custom_call.1} parent=43 // pred_fallthru
          _
        // Predicated region
        $region57: #{tpu_custom_call.1} parent=43 // pred_check
          %p293 = pneg %p106
        $region58: #{tpu_custom_call.1} parent=43 // pred_check_branch
          %295 = sbr.rel (%p293) target = $region60
        $region59: #{tpu_custom_call.1} parent=43 // pred_region
          %296 = dma.done [#allocation8], 1024
        $region60: #{tpu_custom_call.1} parent=43 // pred_fallthru
          _
        // Predicated region
        $region61: #{tpu_custom_call.1} parent=43 // pred_check
          %p297 = pneg %p127
        $region62: #{tpu_custom_call.1} parent=43 // pred_check_branch
          %299 = sbr.rel (%p297) target = $region64
        $region63: #{tpu_custom_call.1} parent=43 // pred_region
          %300 = dma.done [#allocation8], 1024
        $region64: #{tpu_custom_call.1} parent=43 // pred_fallthru
          _
        %s301 = sand.u32 %s30, 1
        %s302 = scalar_lea.sflag [#allocation3], %s301
        %s303 = sand.u32 %s30, 1
        %s304 = smul.addr %s303, 32
        %s305 = scalar_lea.vmem [#allocation2], %s304
        %p306 = pneg %p43
        %p307 = pneg %p40
        %p308 = pneg %p64
        %p309 = pneg %p61
        %p310 = pneg %p85
        %p311 = pneg %p82
        %p312 = pneg %p106
        %p313 = pneg %p103
        %p314 = pneg %p127
        %p315 = pneg %p124
        %p316 = pneg %p148
        %p317 = pneg %p145
        %p318 = pneg %p174
        %p319 = pneg %p171
        %s320 = smul.u32 8, %s22
        %p321 = scmp.lt.s32.totalorder %s320, 15
        %s322 = scalar_select %p321, %s320, 15
        %s323 = smul.addr %s322, 8
        %s324 = scalar_lea.vmem %s6, %s323
        %s325 = smul.u32 8, %s22
        %s326 = smul.u32 8, %s22
        %p327 = scmp.lt.s32.totalorder %s326, 15
        %s328 = scalar_select %p327, %s326, 15
        %s329 = smul.addr %s328, 8
        %s330 = scalar_lea.vmem %s6, %s329
        %s331 = smul.u32 8, %s22
        %v333 = vld [vmem:[%s280] sm:$0xf]
        %v334 = vld [vmem:[%s280 + $0x4] sm:$0xf]
        %v335 = vld [vmem:[%s280 + $0x8] sm:$0xf]
        %v336 = vld [vmem:[%s280 + $0xc] sm:$0xf]
        %v337 = vld [vmem:[%s280 + $0x10] sm:$0xf]
        %v338 = vld [vmem:[%s280 + $0x14] sm:$0xf]
        %v339 = vld [vmem:[%s280 + $0x18] sm:$0xf]
        %v340 = vld [vmem:[%s280 + $0x1c] sm:$0xf]
        %v341 = vunpack.c.l.bf16 %v333
        %v342 = vunpack.c.l.bf16 %v334
        %v343 = vunpack.c.l.bf16 %v335
        %v344 = vunpack.c.l.bf16 %v336
        %v345 = vunpack.c.l.bf16 %v337
        %v346 = vunpack.c.l.bf16 %v338
        %v347 = vunpack.c.l.bf16 %v339
        %v348 = vunpack.c.l.bf16 %v340
        %v349 = vld [vmem:[#allocation6] sm:$0x1]
        %v350 = vld [vmem:[#allocation6 + $0x1] sm:$0x1]
        %v351 = vld [vmem:[#allocation6 + $0x2] sm:$0x1]
        %v352 = vld [vmem:[#allocation4] sm:$0xf]
        %v353 = vld [vmem:[#allocation4 + $0x4] sm:$0xf]
        %v354 = vld [vmem:[#allocation4 + $0x8] sm:$0xf]
        %v355 = vld [vmem:[#allocation4 + $0xc] sm:$0xf]
        %v356 = vld [vmem:[#allocation4 + $0x10] sm:$0xf]
        %v357 = vld [vmem:[#allocation4 + $0x14] sm:$0xf]
        %v358 = vld [vmem:[#allocation4 + $0x18] sm:$0xf]
        %v359 = vld [vmem:[#allocation4 + $0x1c] sm:$0xf]
        %v360 = vld [vmem:[#allocation4 + $0x20] sm:$0xf]
        %v361 = vld [vmem:[#allocation4 + $0x24] sm:$0xf]
        %v362 = vld [vmem:[#allocation4 + $0x28] sm:$0xf]
        %v363 = vld [vmem:[#allocation4 + $0x2c] sm:$0xf]
        %v364 = vld [vmem:[#allocation4 + $0x30] sm:$0xf]
        %v365 = vld [vmem:[#allocation4 + $0x34] sm:$0xf]
        %v366 = vld [vmem:[#allocation4 + $0x38] sm:$0xf]
        %v367 = vld [vmem:[#allocation4 + $0x3c] sm:$0xf]
        %v368 = vlaneseq
        %v369 = vshrl.u32 %v368, 7
        %v370 = vsub.s32 0, %v369
        %v371 = vrot.slane %v349, %v370
        %v380 = vunpack.c.l.b16 %v333
        %v381 = vunpack.c.l.b16 %v334
        %v382 = vunpack.c.l.b16 %v335
        %v383 = vunpack.c.l.b16 %v336
        %v384 = vunpack.c.l.b16 %v337
        %v385 = vunpack.c.l.b16 %v338
        %v386 = vunpack.c.l.b16 %v339
        %v387 = vunpack.c.l.b16 %v340
        %v388 = vpack.c.b16 %v381, %v380
        %v389 = vpack.c.b16 %v383, %v382
        %v390 = vpack.c.b16 %v385, %v384
        %v391 = vpack.c.b16 %v387, %v386
        %v412 = vunpack.c.l.b16 %v352
        %v413 = vunpack.c.l.b16 %v353
        %v414 = vunpack.c.l.b16 %v354
        %v415 = vunpack.c.l.b16 %v355
        %v416 = vunpack.c.l.b16 %v356
        %v417 = vunpack.c.l.b16 %v357
        %v418 = vunpack.c.l.b16 %v358
        %v419 = vunpack.c.l.b16 %v359
        %v420 = vunpack.c.l.b16 %v360
        %v421 = vunpack.c.l.b16 %v361
        %v422 = vunpack.c.l.b16 %v362
        %v423 = vunpack.c.l.b16 %v363
        %v424 = vunpack.c.l.b16 %v364
        %v425 = vunpack.c.l.b16 %v365
        %v426 = vunpack.c.l.b16 %v366
        %v427 = vunpack.c.l.b16 %v367
        %v428 = vpack.c.b16 %v413, %v412
        %v429 = vpack.c.b16 %v415, %v414
        %v430 = vpack.c.b16 %v417, %v416
        %v431 = vpack.c.b16 %v419, %v418
        %v432 = vpack.c.b16 %v421, %v420
        %v433 = vpack.c.b16 %v423, %v422
        %v434 = vpack.c.b16 %v425, %v424
        %v435 = vpack.c.b16 %v427, %v426
        %444 = vmatprep.subr.bf16.mxu0 0
        %445 = vmatpush1.bf16.msra.mxu0 %v428
        %446 = vmatprep.subr.bf16.mxu0 0
        %447 = vmatpush1.bf16.msra.mxu0 %v429
        %448 = vmatprep.subr.bf16.mxu0 0
        %449 = vmatpush1.bf16.msra.mxu0 %v430
        %450 = vmatprep.subr.bf16.mxu0 0
        %451 = vmatpush1.bf16.msra.mxu0 %v431
        %452 = vmatprep.subr.bf16.mxu0 0
        %453 = vmatpush1.bf16.msra.mxu0 %v432
        %454 = vmatprep.subr.bf16.mxu0 0
        %455 = vmatpush1.bf16.msra.mxu0 %v433
        %456 = vmatprep.subr.bf16.mxu0 0
        %457 = vmatpush1.bf16.msra.mxu0 %v434
        %458 = vmatprep.subr.bf16.mxu0 0
        %459 = vmatpush1.bf16.msra.mxu0 %v435
        %460 = vmatprep.subr.bf16.mxu0 0
        %461 = vmatpush1.bf16.msra.mxu0 0
        %462 = vmatprep.subr.bf16.mxu0 0
        %463 = vmatpush1.bf16.msra.mxu0 0
        %464 = vmatprep.subr.bf16.mxu0 0
        %465 = vmatpush1.bf16.msra.mxu0 0
        %466 = vmatprep.subr.bf16.mxu0 0
        %467 = vmatpush1.bf16.msra.mxu0 0
        %468 = vmatprep.subr.bf16.mxu0 0
        %469 = vmatpush1.bf16.msra.mxu0 0
        %470 = vmatprep.subr.bf16.mxu0 0
        %471 = vmatpush1.bf16.msra.mxu0 0
        %472 = vmatprep.subr.bf16.mxu0 0
        %473 = vmatpush1.bf16.msra.mxu0 0
        %474 = vmatprep.subr.bf16.mxu0 0
        %475 = vmatpush1.bf16.msra.mxu0 0
        %476 = vmatprep.mubr.bf16.mxu0 0
        %477 = vmatmul.mubr.bf16.gmra.mrb[0].mxu0 %v388
        %v478 = vpop.f32.mrb[0].mxu0
        %v479 = vadd.f32 %v371, %v478
        %v480 = vpop.f32.mrb[0].mxu0
        %v481 = vpop.f32.mrb[0].mxu0
        %v482 = vadd.f32 %v371, %v481
        %v483 = vpop.f32.mrb[0].mxu0
        %484 = vmatprep.mubr.bf16.mxu0 0
        %485 = vmatmul.mubr.bf16.gmra.mrb[0].mxu0 %v389
        %v486 = vpop.f32.mrb[0].mxu0
        %v487 = vadd.f32 %v371, %v486
        %v488 = vpop.f32.mrb[0].mxu0
        %v489 = vpop.f32.mrb[0].mxu0
        %v490 = vadd.f32 %v371, %v489
        %v491 = vpop.f32.mrb[0].mxu0
        %492 = vmatprep.mubr.bf16.mxu0 0
        %493 = vmatmul.mubr.bf16.gmra.mrb[0].mxu0 %v390
        %v494 = vpop.f32.mrb[0].mxu0
        %v495 = vadd.f32 %v371, %v494
        %v496 = vpop.f32.mrb[0].mxu0
        %v497 = vpop.f32.mrb[0].mxu0
        %v498 = vadd.f32 %v371, %v497
        %v499 = vpop.f32.mrb[0].mxu0
        %500 = vmatprep.mubr.bf16.mxu0 0
        %501 = vmatmul.mubr.bf16.gmra.mrb[0].mxu0 %v391
        %v502 = vpop.f32.mrb[0].mxu0
        %v503 = vadd.f32 %v371, %v502
        %v504 = vpop.f32.mrb[0].mxu0
        %v505 = vpop.f32.mrb[0].mxu0
        %v506 = vadd.f32 %v371, %v505
        %v507 = vpop.f32.mrb[0].mxu0
        %508 = vdwg.mxu0
        %v509 = vmul.f32 %v341, %v479
        %v510 = vmul.f32 %v342, %v482
        %v511 = vmul.f32 %v343, %v487
        %v512 = vmul.f32 %v344, %v490
        %v513 = vmul.f32 %v345, %v495
        %v514 = vmul.f32 %v346, %v498
        %v515 = vmul.f32 %v347, %v503
        %v516 = vmul.f32 %v348, %v506
        %v517 = vadd.f32 %v509, %v341
        %v518 = vadd.f32 %v510, %v342
        %v519 = vadd.f32 %v511, %v343
        %v520 = vadd.f32 %v512, %v344
        %v521 = vadd.f32 %v513, %v345
        %v522 = vadd.f32 %v514, %v346
        %v523 = vadd.f32 %v515, %v347
        %v524 = vadd.f32 %v516, %v348
        %525 = vadd.xlane.f32.xlu0 %v517
        %v526 = vpop.xlane.xlu0 %525
        %527 = vadd.xlane.f32.xlu0 %v518
        %v528 = vpop.xlane.xlu0 %527
        %529 = vadd.xlane.f32.xlu0 %v519
        %v530 = vpop.xlane.xlu0 %529
        %531 = vadd.xlane.f32.xlu0 %v520
        %v532 = vpop.xlane.xlu0 %531
        %533 = vadd.xlane.f32.xlu0 %v521
        %v534 = vpop.xlane.xlu0 %533
        %535 = vadd.xlane.f32.xlu0 %v522
        %v536 = vpop.xlane.xlu0 %535
        %537 = vadd.xlane.f32.xlu0 %v523
        %v538 = vpop.xlane.xlu0 %537
        %539 = vadd.xlane.f32.xlu0 %v524
        %v540 = vpop.xlane.xlu0 %539
        %v541 = vmul.f32 %v517, %v517
        %v542 = vmul.f32 %v518, %v518
        %v543 = vmul.f32 %v519, %v519
        %v544 = vmul.f32 %v520, %v520
        %v545 = vmul.f32 %v521, %v521
        %v546 = vmul.f32 %v522, %v522
        %v547 = vmul.f32 %v523, %v523
        %v548 = vmul.f32 %v524, %v524
        %549 = vadd.xlane.f32.xlu0 %v541
        %v550 = vpop.xlane.xlu0 %549
        %551 = vadd.xlane.f32.xlu0 %v542
        %v552 = vpop.xlane.xlu0 %551
        %553 = vadd.xlane.f32.xlu0 %v543
        %v554 = vpop.xlane.xlu0 %553
        %555 = vadd.xlane.f32.xlu0 %v544
        %v556 = vpop.xlane.xlu0 %555
        %557 = vadd.xlane.f32.xlu0 %v545
        %v558 = vpop.xlane.xlu0 %557
        %559 = vadd.xlane.f32.xlu0 %v546
        %v560 = vpop.xlane.xlu0 %559
        %561 = vadd.xlane.f32.xlu0 %v547
        %v562 = vpop.xlane.xlu0 %561
        %563 = vadd.xlane.f32.xlu0 %v548
        %v564 = vpop.xlane.xlu0 %563
        %v565 = vmul.f32 %v526, 0.0125
        %v566 = vmul.f32 %v528, 0.0125
        %v567 = vmul.f32 %v530, 0.0125
        %v568 = vmul.f32 %v532, 0.0125
        %v569 = vmul.f32 %v534, 0.0125
        %v570 = vmul.f32 %v536, 0.0125
        %v571 = vmul.f32 %v538, 0.0125
        %v572 = vmul.f32 %v540, 0.0125
        %v573 = vmul.f32 %v550, 0.0125
        %v574 = vmul.f32 %v552, 0.0125
        %v575 = vmul.f32 %v554, 0.0125
        %v576 = vmul.f32 %v556, 0.0125
        %v577 = vmul.f32 %v558, 0.0125
        %v578 = vmul.f32 %v560, 0.0125
        %v579 = vmul.f32 %v562, 0.0125
        %v580 = vmul.f32 %v564, 0.0125
        %v581 = vmul.f32 %v565, %v565
        %v582 = vmul.f32 %v566, %v566
        %v583 = vmul.f32 %v567, %v567
        %v584 = vmul.f32 %v568, %v568
        %v585 = vmul.f32 %v569, %v569
        %v586 = vmul.f32 %v570, %v570
        %v587 = vmul.f32 %v571, %v571
        %v588 = vmul.f32 %v572, %v572
        %v589 = vsub.f32 %v573, %v581
        %v590 = vsub.f32 %v574, %v582
        %v591 = vsub.f32 %v575, %v583
        %v592 = vsub.f32 %v576, %v584
        %v593 = vsub.f32 %v577, %v585
        %v594 = vsub.f32 %v578, %v586
        %v595 = vsub.f32 %v579, %v587
        %v596 = vsub.f32 %v580, %v588
        %v597 = vadd.f32 %v589, 1e-05
        %v598 = vadd.f32 %v590, 1e-05
        %v599 = vadd.f32 %v591, 1e-05
        %v600 = vadd.f32 %v592, 1e-05
        %v601 = vadd.f32 %v593, 1e-05
        %v602 = vadd.f32 %v594, 1e-05
        %v603 = vadd.f32 %v595, 1e-05
        %v604 = vadd.f32 %v596, 1e-05
        %v605 = vrsqrt.pop %v597
        %v606 = vrsqrt.pop %v598
        %v607 = vrsqrt.pop %v599
        %v608 = vrsqrt.pop %v600
        %v609 = vrsqrt.pop %v601
        %v610 = vrsqrt.pop %v602
        %v611 = vrsqrt.pop %v603
        %v612 = vrsqrt.pop %v604
        %v613 = vsub.f32 %v517, %v565
        %v614 = vsub.f32 %v518, %v566
        %v615 = vsub.f32 %v519, %v567
        %v616 = vsub.f32 %v520, %v568
        %v617 = vsub.f32 %v521, %v569
        %v618 = vsub.f32 %v522, %v570
        %v619 = vsub.f32 %v523, %v571
        %v620 = vsub.f32 %v524, %v572
        %v621 = vmul.f32 %v613, %v605
        %v622 = vmul.f32 %v614, %v606
        %v623 = vmul.f32 %v615, %v607
        %v624 = vmul.f32 %v616, %v608
        %v625 = vmul.f32 %v617, %v609
        %v626 = vmul.f32 %v618, %v610
        %v627 = vmul.f32 %v619, %v611
        %v628 = vmul.f32 %v620, %v612
        %v629 = vlaneseq
        %v630 = vshrl.u32 %v629, 7
        %v631 = vsub.s32 0, %v630
        %v632 = vrot.slane %v350, %v631
        %v633 = vmul.f32 %v621, %v632
        %v634 = vmul.f32 %v622, %v632
        %v635 = vmul.f32 %v623, %v632
        %v636 = vmul.f32 %v624, %v632
        %v637 = vmul.f32 %v625, %v632
        %v638 = vmul.f32 %v626, %v632
        %v639 = vmul.f32 %v627, %v632
        %v640 = vmul.f32 %v628, %v632
        %v641 = vlaneseq
        %v642 = vshrl.u32 %v641, 7
        %v643 = vsub.s32 0, %v642
        %v644 = vrot.slane %v351, %v643
        %v645 = vadd.f32 %v633, %v644
        %v646 = vadd.f32 %v634, %v644
        %v647 = vadd.f32 %v635, %v644
        %v648 = vadd.f32 %v636, %v644
        %v649 = vadd.f32 %v637, %v644
        %v650 = vadd.f32 %v638, %v644
        %v651 = vadd.f32 %v639, %v644
        %v652 = vadd.f32 %v640, %v644
        %s653 = scalar_lea.vmem [#allocation6], 4
        %v654 = vld [vmem:[%s653] sm:$0x1]
        %v655 = vld [vmem:[%s653 + $0x1] sm:$0x1]
        %v656 = vld [vmem:[%s653 + $0x2] sm:$0x1]
        %v657 = vpack.c.bf16 %v646, %v645
        %v658 = vpack.c.bf16 %v648, %v647
        %v659 = vpack.c.bf16 %v650, %v649
        %v660 = vpack.c.bf16 %v652, %v651
        %s661 = scalar_lea.vmem [#allocation4], 64
        %v662 = vld [vmem:[%s661] sm:$0xf]
        %v663 = vld [vmem:[%s661 + $0x4] sm:$0xf]
        %v664 = vld [vmem:[%s661 + $0x8] sm:$0xf]
        %v665 = vld [vmem:[%s661 + $0xc] sm:$0xf]
        %v666 = vld [vmem:[%s661 + $0x10] sm:$0xf]
        %v667 = vld [vmem:[%s661 + $0x14] sm:$0xf]
        %v668 = vld [vmem:[%s661 + $0x18] sm:$0xf]
        %v669 = vld [vmem:[%s661 + $0x1c] sm:$0xf]
        %v670 = vld [vmem:[%s661 + $0x20] sm:$0xf]
        %v671 = vld [vmem:[%s661 + $0x24] sm:$0xf]
        %v672 = vld [vmem:[%s661 + $0x28] sm:$0xf]
        %v673 = vld [vmem:[%s661 + $0x2c] sm:$0xf]
        %v674 = vld [vmem:[%s661 + $0x30] sm:$0xf]
        %v675 = vld [vmem:[%s661 + $0x34] sm:$0xf]
        %v676 = vld [vmem:[%s661 + $0x38] sm:$0xf]
        %v677 = vld [vmem:[%s661 + $0x3c] sm:$0xf]
        %v678 = vlaneseq
        %v679 = vshrl.u32 %v678, 7
        %v680 = vsub.s32 0, %v679
        %v681 = vrot.slane %v654, %v680
        %v698 = vunpack.c.l.b16 %v662
        %v699 = vunpack.c.l.b16 %v663
        %v700 = vunpack.c.l.b16 %v664
        %v701 = vunpack.c.l.b16 %v665
        %v702 = vunpack.c.l.b16 %v666
        %v703 = vunpack.c.l.b16 %v667
        %v704 = vunpack.c.l.b16 %v668
        %v705 = vunpack.c.l.b16 %v669
        %v706 = vunpack.c.l.b16 %v670
        %v707 = vunpack.c.l.b16 %v671
        %v708 = vunpack.c.l.b16 %v672
        %v709 = vunpack.c.l.b16 %v673
        %v710 = vunpack.c.l.b16 %v674
        %v711 = vunpack.c.l.b16 %v675
        %v712 = vunpack.c.l.b16 %v676
        %v713 = vunpack.c.l.b16 %v677
        %v714 = vpack.c.b16 %v699, %v698
        %v715 = vpack.c.b16 %v701, %v700
        %v716 = vpack.c.b16 %v703, %v702
        %v717 = vpack.c.b16 %v705, %v704
        %v718 = vpack.c.b16 %v707, %v706
        %v719 = vpack.c.b16 %v709, %v708
        %v720 = vpack.c.b16 %v711, %v710
        %v721 = vpack.c.b16 %v713, %v712
        %730 = vmatprep.subr.bf16.mxu0 0
        %731 = vmatpush1.bf16.msra.mxu0 %v714
        %732 = vmatprep.subr.bf16.mxu0 0
        %733 = vmatpush1.bf16.msra.mxu0 %v715
        %734 = vmatprep.subr.bf16.mxu0 0
        %735 = vmatpush1.bf16.msra.mxu0 %v716
        %736 = vmatprep.subr.bf16.mxu0 0
        %737 = vmatpush1.bf16.msra.mxu0 %v717
        %738 = vmatprep.subr.bf16.mxu0 0
        %739 = vmatpush1.bf16.msra.mxu0 %v718
        %740 = vmatprep.subr.bf16.mxu0 0
        %741 = vmatpush1.bf16.msra.mxu0 %v719
        %742 = vmatprep.subr.bf16.mxu0 0
        %743 = vmatpush1.bf16.msra.mxu0 %v720
        %744 = vmatprep.subr.bf16.mxu0 0
        %745 = vmatpush1.bf16.msra.mxu0 %v721
        %746 = vmatprep.subr.bf16.mxu0 0
        %747 = vmatpush1.bf16.msra.mxu0 0
        %748 = vmatprep.subr.bf16.mxu0 0
        %749 = vmatpush1.bf16.msra.mxu0 0
        %750 = vmatprep.subr.bf16.mxu0 0
        %751 = vmatpush1.bf16.msra.mxu0 0
        %752 = vmatprep.subr.bf16.mxu0 0
        %753 = vmatpush1.bf16.msra.mxu0 0
        %754 = vmatprep.subr.bf16.mxu0 0
        %755 = vmatpush1.bf16.msra.mxu0 0
        %756 = vmatprep.subr.bf16.mxu0 0
        %757 = vmatpush1.bf16.msra.mxu0 0
        %758 = vmatprep.subr.bf16.mxu0 0
        %759 = vmatpush1.bf16.msra.mxu0 0
        %760 = vmatprep.subr.bf16.mxu0 0
        %761 = vmatpush1.bf16.msra.mxu0 0
        %762 = vmatprep.mubr.bf16.mxu0 0
        %763 = vmatmul.mubr.bf16.gmra.mrb[0].mxu0 %v657
        %v764 = vpop.f32.mrb[0].mxu0
        %v765 = vadd.f32 %v681, %v764
        %v766 = vpop.f32.mrb[0].mxu0
        %v767 = vpop.f32.mrb[0].mxu0
        %v768 = vadd.f32 %v681, %v767
        %v769 = vpop.f32.mrb[0].mxu0
        %770 = vmatprep.mubr.bf16.mxu0 0
        %771 = vmatmul.mubr.bf16.gmra.mrb[0].mxu0 %v658
        %v772 = vpop.f32.mrb[0].mxu0
        %v773 = vadd.f32 %v681, %v772
        %v774 = vpop.f32.mrb[0].mxu0
        %v775 = vpop.f32.mrb[0].mxu0
        %v776 = vadd.f32 %v681, %v775
        %v777 = vpop.f32.mrb[0].mxu0
        %778 = vmatprep.mubr.bf16.mxu0 0
        %779 = vmatmul.mubr.bf16.gmra.mrb[0].mxu0 %v659
        %v780 = vpop.f32.mrb[0].mxu0
        %v781 = vadd.f32 %v681, %v780
        %v782 = vpop.f32.mrb[0].mxu0
        %v783 = vpop.f32.mrb[0].mxu0
        %v784 = vadd.f32 %v681, %v783
        %v785 = vpop.f32.mrb[0].mxu0
        %786 = vmatprep.mubr.bf16.mxu0 0
        %787 = vmatmul.mubr.bf16.gmra.mrb[0].mxu0 %v660
        %v788 = vpop.f32.mrb[0].mxu0
        %v789 = vadd.f32 %v681, %v788
        %v790 = vpop.f32.mrb[0].mxu0
        %v791 = vpop.f32.mrb[0].mxu0
        %v792 = vadd.f32 %v681, %v791
        %v793 = vpop.f32.mrb[0].mxu0
        %794 = vdwg.mxu0
        %v795 = vmul.f32 %v341, %v765
        %v796 = vmul.f32 %v342, %v768
        %v797 = vmul.f32 %v343, %v773
        %v798 = vmul.f32 %v344, %v776
        %v799 = vmul.f32 %v345, %v781
        %v800 = vmul.f32 %v346, %v784
        %v801 = vmul.f32 %v347, %v789
        %v802 = vmul.f32 %v348, %v792
        %v803 = vadd.f32 %v795, %v645
        %v804 = vadd.f32 %v796, %v646
        %v805 = vadd.f32 %v797, %v647
        %v806 = vadd.f32 %v798, %v648
        %v807 = vadd.f32 %v799, %v649
        %v808 = vadd.f32 %v800, %v650
        %v809 = vadd.f32 %v801, %v651
        %v810 = vadd.f32 %v802, %v652
        %811 = vadd.xlane.f32.xlu0 %v803
        %v812 = vpop.xlane.xlu0 %811
        %813 = vadd.xlane.f32.xlu0 %v804
        %v814 = vpop.xlane.xlu0 %813
        %815 = vadd.xlane.f32.xlu0 %v805
        %v816 = vpop.xlane.xlu0 %815
        %817 = vadd.xlane.f32.xlu0 %v806
        %v818 = vpop.xlane.xlu0 %817
        %819 = vadd.xlane.f32.xlu0 %v807
        %v820 = vpop.xlane.xlu0 %819
        %821 = vadd.xlane.f32.xlu0 %v808
        %v822 = vpop.xlane.xlu0 %821
        %823 = vadd.xlane.f32.xlu0 %v809
        %v824 = vpop.xlane.xlu0 %823
        %825 = vadd.xlane.f32.xlu0 %v810
        %v826 = vpop.xlane.xlu0 %825
        %v827 = vmul.f32 %v803, %v803
        %v828 = vmul.f32 %v804, %v804
        %v829 = vmul.f32 %v805, %v805
        %v830 = vmul.f32 %v806, %v806
        %v831 = vmul.f32 %v807, %v807
        %v832 = vmul.f32 %v808, %v808
        %v833 = vmul.f32 %v809, %v809
        %v834 = vmul.f32 %v810, %v810
        %835 = vadd.xlane.f32.xlu0 %v827
        %v836 = vpop.xlane.xlu0 %835
        %837 = vadd.xlane.f32.xlu0 %v828
        %v838 = vpop.xlane.xlu0 %837
        %839 = vadd.xlane.f32.xlu0 %v829
        %v840 = vpop.xlane.xlu0 %839
        %841 = vadd.xlane.f32.xlu0 %v830
        %v842 = vpop.xlane.xlu0 %841
        %843 = vadd.xlane.f32.xlu0 %v831
        %v844 = vpop.xlane.xlu0 %843
        %845 = vadd.xlane.f32.xlu0 %v832
        %v846 = vpop.xlane.xlu0 %845
        %847 = vadd.xlane.f32.xlu0 %v833
        %v848 = vpop.xlane.xlu0 %847
        %849 = vadd.xlane.f32.xlu0 %v834
        %v850 = vpop.xlane.xlu0 %849
        %v851 = vmul.f32 %v812, 0.0125
        %v852 = vmul.f32 %v814, 0.0125
        %v853 = vmul.f32 %v816, 0.0125
        %v854 = vmul.f32 %v818, 0.0125
        %v855 = vmul.f32 %v820, 0.0125
        %v856 = vmul.f32 %v822, 0.0125
        %v857 = vmul.f32 %v824, 0.0125
        %v858 = vmul.f32 %v826, 0.0125
        %v859 = vmul.f32 %v836, 0.0125
        %v860 = vmul.f32 %v838, 0.0125
        %v861 = vmul.f32 %v840, 0.0125
        %v862 = vmul.f32 %v842, 0.0125
        %v863 = vmul.f32 %v844, 0.0125
        %v864 = vmul.f32 %v846, 0.0125
        %v865 = vmul.f32 %v848, 0.0125
        %v866 = vmul.f32 %v850, 0.0125
        %v867 = vmul.f32 %v851, %v851
        %v868 = vmul.f32 %v852, %v852
        %v869 = vmul.f32 %v853, %v853
        %v870 = vmul.f32 %v854, %v854
        %v871 = vmul.f32 %v855, %v855
        %v872 = vmul.f32 %v856, %v856
        %v873 = vmul.f32 %v857, %v857
        %v874 = vmul.f32 %v858, %v858
        %v875 = vsub.f32 %v859, %v867
        %v876 = vsub.f32 %v860, %v868
        %v877 = vsub.f32 %v861, %v869
        %v878 = vsub.f32 %v862, %v870
        %v879 = vsub.f32 %v863, %v871
        %v880 = vsub.f32 %v864, %v872
        %v881 = vsub.f32 %v865, %v873
        %v882 = vsub.f32 %v866, %v874
        %v883 = vadd.f32 %v875, 1e-05
        %v884 = vadd.f32 %v876, 1e-05
        %v885 = vadd.f32 %v877, 1e-05
        %v886 = vadd.f32 %v878, 1e-05
        %v887 = vadd.f32 %v879, 1e-05
        %v888 = vadd.f32 %v880, 1e-05
        %v889 = vadd.f32 %v881, 1e-05
        %v890 = vadd.f32 %v882, 1e-05
        %v891 = vrsqrt.pop %v883
        %v892 = vrsqrt.pop %v884
        %v893 = vrsqrt.pop %v885
        %v894 = vrsqrt.pop %v886
        %v895 = vrsqrt.pop %v887
        %v896 = vrsqrt.pop %v888
        %v897 = vrsqrt.pop %v889
        %v898 = vrsqrt.pop %v890
        %v899 = vsub.f32 %v803, %v851
        %v900 = vsub.f32 %v804, %v852
        %v901 = vsub.f32 %v805, %v853
        %v902 = vsub.f32 %v806, %v854
        %v903 = vsub.f32 %v807, %v855
        %v904 = vsub.f32 %v808, %v856
        %v905 = vsub.f32 %v809, %v857
        %v906 = vsub.f32 %v810, %v858
        %v907 = vmul.f32 %v899, %v891
        %v908 = vmul.f32 %v900, %v892
        %v909 = vmul.f32 %v901, %v893
        %v910 = vmul.f32 %v902, %v894
        %v911 = vmul.f32 %v903, %v895
        %v912 = vmul.f32 %v904, %v896
        %v913 = vmul.f32 %v905, %v897
        %v914 = vmul.f32 %v906, %v898
        %v915 = vlaneseq
        %v916 = vshrl.u32 %v915, 7
        %v917 = vsub.s32 0, %v916
        %v918 = vrot.slane %v655, %v917
        %v919 = vmul.f32 %v907, %v918
        %v920 = vmul.f32 %v908, %v918
        %v921 = vmul.f32 %v909, %v918
        %v922 = vmul.f32 %v910, %v918
        %v923 = vmul.f32 %v911, %v918
        %v924 = vmul.f32 %v912, %v918
        %v925 = vmul.f32 %v913, %v918
        %v926 = vmul.f32 %v914, %v918
        %v927 = vlaneseq
        %v928 = vshrl.u32 %v927, 7
        %v929 = vsub.s32 0, %v928
        %v930 = vrot.slane %v656, %v929
        %v931 = vadd.f32 %v919, %v930
        %v932 = vadd.f32 %v920, %v930
        %v933 = vadd.f32 %v921, %v930
        %v934 = vadd.f32 %v922, %v930
        %v935 = vadd.f32 %v923, %v930
        %v936 = vadd.f32 %v924, %v930
        %v937 = vadd.f32 %v925, %v930
        %v938 = vadd.f32 %v926, %v930
        %s939 = scalar_lea.vmem [#allocation6], 8
        %v940 = vld [vmem:[%s939] sm:$0x1]
        %v941 = vld [vmem:[%s939 + $0x1] sm:$0x1]
        %v942 = vld [vmem:[%s939 + $0x2] sm:$0x1]
        %v943 = vpack.c.bf16 %v932, %v931
        %v944 = vpack.c.bf16 %v934, %v933
        %v945 = vpack.c.bf16 %v936, %v935
        %v946 = vpack.c.bf16 %v938, %v937
        %s947 = scalar_lea.vmem [#allocation4], 128
        %v948 = vld [vmem:[%s947] sm:$0xf]
        %v949 = vld [vmem:[%s947 + $0x4] sm:$0xf]
        %v950 = vld [vmem:[%s947 + $0x8] sm:$0xf]
        %v951 = vld [vmem:[%s947 + $0xc] sm:$0xf]
        %v952 = vld [vmem:[%s947 + $0x10] sm:$0xf]
        %v953 = vld [vmem:[%s947 + $0x14] sm:$0xf]
        %v954 = vld [vmem:[%s947 + $0x18] sm:$0xf]
        %v955 = vld [vmem:[%s947 + $0x1c] sm:$0xf]
        %v956 = vld [vmem:[%s947 + $0x20] sm:$0xf]
        %v957 = vld [vmem:[%s947 + $0x24] sm:$0xf]
        %v958 = vld [vmem:[%s947 + $0x28] sm:$0xf]
        %v959 = vld [vmem:[%s947 + $0x2c] sm:$0xf]
        %v960 = vld [vmem:[%s947 + $0x30] sm:$0xf]
        %v961 = vld [vmem:[%s947 + $0x34] sm:$0xf]
        %v962 = vld [vmem:[%s947 + $0x38] sm:$0xf]
        %v963 = vld [vmem:[%s947 + $0x3c] sm:$0xf]
        %v964 = vlaneseq
        %v965 = vshrl.u32 %v964, 7
        %v966 = vsub.s32 0, %v965
        %v967 = vrot.slane %v940, %v966
        %v984 = vunpack.c.l.b16 %v948
        %v985 = vunpack.c.l.b16 %v949
        %v986 = vunpack.c.l.b16 %v950
        %v987 = vunpack.c.l.b16 %v951
        %v988 = vunpack.c.l.b16 %v952
        %v989 = vunpack.c.l.b16 %v953
        %v990 = vunpack.c.l.b16 %v954
        %v991 = vunpack.c.l.b16 %v955
        %v992 = vunpack.c.l.b16 %v956
        %v993 = vunpack.c.l.b16 %v957
        %v994 = vunpack.c.l.b16 %v958
        %v995 = vunpack.c.l.b16 %v959
        %v996 = vunpack.c.l.b16 %v960
        %v997 = vunpack.c.l.b16 %v961
        %v998 = vunpack.c.l.b16 %v962
        %v999 = vunpack.c.l.b16 %v963
        %v1000 = vpack.c.b16 %v985, %v984
        %v1001 = vpack.c.b16 %v987, %v986
        %v1002 = vpack.c.b16 %v989, %v988
        %v1003 = vpack.c.b16 %v991, %v990
        %v1004 = vpack.c.b16 %v993, %v992
        %v1005 = vpack.c.b16 %v995, %v994
        %v1006 = vpack.c.b16 %v997, %v996
        %v1007 = vpack.c.b16 %v999, %v998
        %1016 = vmatprep.subr.bf16.mxu0 0
        %1017 = vmatpush1.bf16.msra.mxu0 %v1000
        %1018 = vmatprep.subr.bf16.mxu0 0
        %1019 = vmatpush1.bf16.msra.mxu0 %v1001
        %1020 = vmatprep.subr.bf16.mxu0 0
        %1021 = vmatpush1.bf16.msra.mxu0 %v1002
        %1022 = vmatprep.subr.bf16.mxu0 0
        %1023 = vmatpush1.bf16.msra.mxu0 %v1003
        %1024 = vmatprep.subr.bf16.mxu0 0
        %1025 = vmatpush1.bf16.msra.mxu0 %v1004
        %1026 = vmatprep.subr.bf16.mxu0 0
        %1027 = vmatpush1.bf16.msra.mxu0 %v1005
        %1028 = vmatprep.subr.bf16.mxu0 0
        %1029 = vmatpush1.bf16.msra.mxu0 %v1006
        %1030 = vmatprep.subr.bf16.mxu0 0
        %1031 = vmatpush1.bf16.msra.mxu0 %v1007
        %1032 = vmatprep.subr.bf16.mxu0 0
        %1033 = vmatpush1.bf16.msra.mxu0 0
        %1034 = vmatprep.subr.bf16.mxu0 0
        %1035 = vmatpush1.bf16.msra.mxu0 0
        %1036 = vmatprep.subr.bf16.mxu0 0
        %1037 = vmatpush1.bf16.msra.mxu0 0
        %1038 = vmatprep.subr.bf16.mxu0 0
        %1039 = vmatpush1.bf16.msra.mxu0 0
        %1040 = vmatprep.subr.bf16.mxu0 0
        %1041 = vmatpush1.bf16.msra.mxu0 0
        %1042 = vmatprep.subr.bf16.mxu0 0
        %1043 = vmatpush1.bf16.msra.mxu0 0
        %1044 = vmatprep.subr.bf16.mxu0 0
        %1045 = vmatpush1.bf16.msra.mxu0 0
        %1046 = vmatprep.subr.bf16.mxu0 0
        %1047 = vmatpush1.bf16.msra.mxu0 0
        %1048 = vmatprep.mubr.bf16.mxu0 0
        %1049 = vmatmul.mubr.bf16.gmra.mrb[0].mxu0 %v943
        %v1050 = vpop.f32.mrb[0].mxu0
        %v1051 = vadd.f32 %v967, %v1050
        %v1052 = vpop.f32.mrb[0].mxu0
        %v1053 = vpop.f32.mrb[0].mxu0
        %v1054 = vadd.f32 %v967, %v1053
        %v1055 = vpop.f32.mrb[0].mxu0
        %1056 = vmatprep.mubr.bf16.mxu0 0
        %1057 = vmatmul.mubr.bf16.gmra.mrb[0].mxu0 %v944
        %v1058 = vpop.f32.mrb[0].mxu0
        %v1059 = vadd.f32 %v967, %v1058
        %v1060 = vpop.f32.mrb[0].mxu0
        %v1061 = vpop.f32.mrb[0].mxu0
        %v1062 = vadd.f32 %v967, %v1061
        %v1063 = vpop.f32.mrb[0].mxu0
        %1064 = vmatprep.mubr.bf16.mxu0 0
        %1065 = vmatmul.mubr.bf16.gmra.mrb[0].mxu0 %v945
        %v1066 = vpop.f32.mrb[0].mxu0
        %v1067 = vadd.f32 %v967, %v1066
        %v1068 = vpop.f32.mrb[0].mxu0
        %v1069 = vpop.f32.mrb[0].mxu0
        %v1070 = vadd.f32 %v967, %v1069
        %v1071 = vpop.f32.mrb[0].mxu0
        %1072 = vmatprep.mubr.bf16.mxu0 0
        %1073 = vmatmul.mubr.bf16.gmra.mrb[0].mxu0 %v946
        %v1074 = vpop.f32.mrb[0].mxu0
        %v1075 = vadd.f32 %v967, %v1074
        %v1076 = vpop.f32.mrb[0].mxu0
        %v1077 = vpop.f32.mrb[0].mxu0
        %v1078 = vadd.f32 %v967, %v1077
        %v1079 = vpop.f32.mrb[0].mxu0
        %1080 = vdwg.mxu0
        %v1081 = vmul.f32 %v341, %v1051
        %v1082 = vmul.f32 %v342, %v1054
        %v1083 = vmul.f32 %v343, %v1059
        %v1084 = vmul.f32 %v344, %v1062
        %v1085 = vmul.f32 %v345, %v1067
        %v1086 = vmul.f32 %v346, %v1070
        %v1087 = vmul.f32 %v347, %v1075
        %v1088 = vmul.f32 %v348, %v1078
        %v1089 = vadd.f32 %v1081, %v931
        %v1090 = vadd.f32 %v1082, %v932
        %v1091 = vadd.f32 %v1083, %v933
        %v1092 = vadd.f32 %v1084, %v934
        %v1093 = vadd.f32 %v1085, %v935
        %v1094 = vadd.f32 %v1086, %v936
        %v1095 = vadd.f32 %v1087, %v937
        %v1096 = vadd.f32 %v1088, %v938
        %1097 = vadd.xlane.f32.xlu0 %v1089
        %v1098 = vpop.xlane.xlu0 %1097
        %1099 = vadd.xlane.f32.xlu0 %v1090
        %v1100 = vpop.xlane.xlu0 %1099
        %1101 = vadd.xlane.f32.xlu0 %v1091
        %v1102 = vpop.xlane.xlu0 %1101
        %1103 = vadd.xlane.f32.xlu0 %v1092
        %v1104 = vpop.xlane.xlu0 %1103
        %1105 = vadd.xlane.f32.xlu0 %v1093
        %v1106 = vpop.xlane.xlu0 %1105
        %1107 = vadd.xlane.f32.xlu0 %v1094
        %v1108 = vpop.xlane.xlu0 %1107
        %1109 = vadd.xlane.f32.xlu0 %v1095
        %v1110 = vpop.xlane.xlu0 %1109
        %1111 = vadd.xlane.f32.xlu0 %v1096
        %v1112 = vpop.xlane.xlu0 %1111
        %v1113 = vmul.f32 %v1089, %v1089
        %v1114 = vmul.f32 %v1090, %v1090
        %v1115 = vmul.f32 %v1091, %v1091
        %v1116 = vmul.f32 %v1092, %v1092
        %v1117 = vmul.f32 %v1093, %v1093
        %v1118 = vmul.f32 %v1094, %v1094
        %v1119 = vmul.f32 %v1095, %v1095
        %v1120 = vmul.f32 %v1096, %v1096
        %1121 = vadd.xlane.f32.xlu0 %v1113
        %v1122 = vpop.xlane.xlu0 %1121
        %1123 = vadd.xlane.f32.xlu0 %v1114
        %v1124 = vpop.xlane.xlu0 %1123
        %1125 = vadd.xlane.f32.xlu0 %v1115
        %v1126 = vpop.xlane.xlu0 %1125
        %1127 = vadd.xlane.f32.xlu0 %v1116
        %v1128 = vpop.xlane.xlu0 %1127
        %1129 = vadd.xlane.f32.xlu0 %v1117
        %v1130 = vpop.xlane.xlu0 %1129
        %1131 = vadd.xlane.f32.xlu0 %v1118
        %v1132 = vpop.xlane.xlu0 %1131
        %1133 = vadd.xlane.f32.xlu0 %v1119
        %v1134 = vpop.xlane.xlu0 %1133
        %1135 = vadd.xlane.f32.xlu0 %v1120
        %v1136 = vpop.xlane.xlu0 %1135
        %v1137 = vmul.f32 %v1098, 0.0125
        %v1138 = vmul.f32 %v1100, 0.0125
        %v1139 = vmul.f32 %v1102, 0.0125
        %v1140 = vmul.f32 %v1104, 0.0125
        %v1141 = vmul.f32 %v1106, 0.0125
        %v1142 = vmul.f32 %v1108, 0.0125
        %v1143 = vmul.f32 %v1110, 0.0125
        %v1144 = vmul.f32 %v1112, 0.0125
        %v1145 = vmul.f32 %v1122, 0.0125
        %v1146 = vmul.f32 %v1124, 0.0125
        %v1147 = vmul.f32 %v1126, 0.0125
        %v1148 = vmul.f32 %v1128, 0.0125
        %v1149 = vmul.f32 %v1130, 0.0125
        %v1150 = vmul.f32 %v1132, 0.0125
        %v1151 = vmul.f32 %v1134, 0.0125
        %v1152 = vmul.f32 %v1136, 0.0125
        %v1153 = vmul.f32 %v1137, %v1137
        %v1154 = vmul.f32 %v1138, %v1138
        %v1155 = vmul.f32 %v1139, %v1139
        %v1156 = vmul.f32 %v1140, %v1140
        %v1157 = vmul.f32 %v1141, %v1141
        %v1158 = vmul.f32 %v1142, %v1142
        %v1159 = vmul.f32 %v1143, %v1143
        %v1160 = vmul.f32 %v1144, %v1144
        %v1161 = vsub.f32 %v1145, %v1153
        %v1162 = vsub.f32 %v1146, %v1154
        %v1163 = vsub.f32 %v1147, %v1155
        %v1164 = vsub.f32 %v1148, %v1156
        %v1165 = vsub.f32 %v1149, %v1157
        %v1166 = vsub.f32 %v1150, %v1158
        %v1167 = vsub.f32 %v1151, %v1159
        %v1168 = vsub.f32 %v1152, %v1160
        %v1169 = vadd.f32 %v1161, 1e-05
        %v1170 = vadd.f32 %v1162, 1e-05
        %v1171 = vadd.f32 %v1163, 1e-05
        %v1172 = vadd.f32 %v1164, 1e-05
        %v1173 = vadd.f32 %v1165, 1e-05
        %v1174 = vadd.f32 %v1166, 1e-05
        %v1175 = vadd.f32 %v1167, 1e-05
        %v1176 = vadd.f32 %v1168, 1e-05
        %v1177 = vrsqrt.pop %v1169
        %v1178 = vrsqrt.pop %v1170
        %v1179 = vrsqrt.pop %v1171
        %v1180 = vrsqrt.pop %v1172
        %v1181 = vrsqrt.pop %v1173
        %v1182 = vrsqrt.pop %v1174
        %v1183 = vrsqrt.pop %v1175
        %v1184 = vrsqrt.pop %v1176
        %v1185 = vsub.f32 %v1089, %v1137
        %v1186 = vsub.f32 %v1090, %v1138
        %v1187 = vsub.f32 %v1091, %v1139
        %v1188 = vsub.f32 %v1092, %v1140
        %v1189 = vsub.f32 %v1093, %v1141
        %v1190 = vsub.f32 %v1094, %v1142
        %v1191 = vsub.f32 %v1095, %v1143
        %v1192 = vsub.f32 %v1096, %v1144
        %v1193 = vmul.f32 %v1185, %v1177
        %v1194 = vmul.f32 %v1186, %v1178
        %v1195 = vmul.f32 %v1187, %v1179
        %v1196 = vmul.f32 %v1188, %v1180
        %v1197 = vmul.f32 %v1189, %v1181
        %v1198 = vmul.f32 %v1190, %v1182
        %v1199 = vmul.f32 %v1191, %v1183
        %v1200 = vmul.f32 %v1192, %v1184
        %v1201 = vlaneseq
        %v1202 = vshrl.u32 %v1201, 7
        %v1203 = vsub.s32 0, %v1202
        %v1204 = vrot.slane %v941, %v1203
        %v1205 = vmul.f32 %v1193, %v1204
        %v1206 = vmul.f32 %v1194, %v1204
        %v1207 = vmul.f32 %v1195, %v1204
        %v1208 = vmul.f32 %v1196, %v1204
        %v1209 = vmul.f32 %v1197, %v1204
        %v1210 = vmul.f32 %v1198, %v1204
        %v1211 = vmul.f32 %v1199, %v1204
        %v1212 = vmul.f32 %v1200, %v1204
        %v1213 = vlaneseq
        %v1214 = vshrl.u32 %v1213, 7
        %v1215 = vsub.s32 0, %v1214
        %v1216 = vrot.slane %v942, %v1215
        %v1217 = vadd.f32 %v1205, %v1216
        %v1218 = vadd.f32 %v1206, %v1216
        %v1219 = vadd.f32 %v1207, %v1216
        %v1220 = vadd.f32 %v1208, %v1216
        %v1221 = vadd.f32 %v1209, %v1216
        %v1222 = vadd.f32 %v1210, %v1216
        %v1223 = vadd.f32 %v1211, %v1216
        %v1224 = vadd.f32 %v1212, %v1216
        %s1225 = scalar_lea.vmem [#allocation6], 12
        %v1226 = vld [vmem:[%s1225] sm:$0x1]
        %v1227 = vld [vmem:[%s1225 + $0x1] sm:$0x1]
        %v1228 = vld [vmem:[%s1225 + $0x2] sm:$0x1]
        %v1229 = vpack.c.bf16 %v1218, %v1217
        %v1230 = vpack.c.bf16 %v1220, %v1219
        %v1231 = vpack.c.bf16 %v1222, %v1221
        %v1232 = vpack.c.bf16 %v1224, %v1223
        %s1233 = scalar_lea.vmem [#allocation4], 192
        %v1234 = vld [vmem:[%s1233] sm:$0xf]
        %v1235 = vld [vmem:[%s1233 + $0x4] sm:$0xf]
        %v1236 = vld [vmem:[%s1233 + $0x8] sm:$0xf]
        %v1237 = vld [vmem:[%s1233 + $0xc] sm:$0xf]
        %v1238 = vld [vmem:[%s1233 + $0x10] sm:$0xf]
        %v1239 = vld [vmem:[%s1233 + $0x14] sm:$0xf]
        %v1240 = vld [vmem:[%s1233 + $0x18] sm:$0xf]
        %v1241 = vld [vmem:[%s1233 + $0x1c] sm:$0xf]
        %v1242 = vld [vmem:[%s1233 + $0x20] sm:$0xf]
        %v1243 = vld [vmem:[%s1233 + $0x24] sm:$0xf]
        %v1244 = vld [vmem:[%s1233 + $0x28] sm:$0xf]
        %v1245 = vld [vmem:[%s1233 + $0x2c] sm:$0xf]
        %v1246 = vld [vmem:[%s1233 + $0x30] sm:$0xf]
        %v1247 = vld [vmem:[%s1233 + $0x34] sm:$0xf]
        %v1248 = vld [vmem:[%s1233 + $0x38] sm:$0xf]
        %v1249 = vld [vmem:[%s1233 + $0x3c] sm:$0xf]
        %v1250 = vlaneseq
        %v1251 = vshrl.u32 %v1250, 7
        %v1252 = vsub.s32 0, %v1251
        %v1253 = vrot.slane %v1226, %v1252
        %v1270 = vunpack.c.l.b16 %v1234
        %v1271 = vunpack.c.l.b16 %v1235
        %v1272 = vunpack.c.l.b16 %v1236
        %v1273 = vunpack.c.l.b16 %v1237
        %v1274 = vunpack.c.l.b16 %v1238
        %v1275 = vunpack.c.l.b16 %v1239
        %v1276 = vunpack.c.l.b16 %v1240
        %v1277 = vunpack.c.l.b16 %v1241
        %v1278 = vunpack.c.l.b16 %v1242
        %v1279 = vunpack.c.l.b16 %v1243
        %v1280 = vunpack.c.l.b16 %v1244
        %v1281 = vunpack.c.l.b16 %v1245
        %v1282 = vunpack.c.l.b16 %v1246
        %v1283 = vunpack.c.l.b16 %v1247
        %v1284 = vunpack.c.l.b16 %v1248
        %v1285 = vunpack.c.l.b16 %v1249
        %v1286 = vpack.c.b16 %v1271, %v1270
        %v1287 = vpack.c.b16 %v1273, %v1272
        %v1288 = vpack.c.b16 %v1275, %v1274
        %v1289 = vpack.c.b16 %v1277, %v1276
        %v1290 = vpack.c.b16 %v1279, %v1278
        %v1291 = vpack.c.b16 %v1281, %v1280
        %v1292 = vpack.c.b16 %v1283, %v1282
        %v1293 = vpack.c.b16 %v1285, %v1284
        %1302 = vmatprep.subr.bf16.mxu0 0
        %1303 = vmatpush1.bf16.msra.mxu0 %v1286
        %1304 = vmatprep.subr.bf16.mxu0 0
        %1305 = vmatpush1.bf16.msra.mxu0 %v1287
        %1306 = vmatprep.subr.bf16.mxu0 0
        %1307 = vmatpush1.bf16.msra.mxu0 %v1288
        %1308 = vmatprep.subr.bf16.mxu0 0
        %1309 = vmatpush1.bf16.msra.mxu0 %v1289
        %1310 = vmatprep.subr.bf16.mxu0 0
        %1311 = vmatpush1.bf16.msra.mxu0 %v1290
        %1312 = vmatprep.subr.bf16.mxu0 0
        %1313 = vmatpush1.bf16.msra.mxu0 %v1291
        %1314 = vmatprep.subr.bf16.mxu0 0
        %1315 = vmatpush1.bf16.msra.mxu0 %v1292
        %1316 = vmatprep.subr.bf16.mxu0 0
        %1317 = vmatpush1.bf16.msra.mxu0 %v1293
        %1318 = vmatprep.subr.bf16.mxu0 0
        %1319 = vmatpush1.bf16.msra.mxu0 0
        %1320 = vmatprep.subr.bf16.mxu0 0
        %1321 = vmatpush1.bf16.msra.mxu0 0
        %1322 = vmatprep.subr.bf16.mxu0 0
        %1323 = vmatpush1.bf16.msra.mxu0 0
        %1324 = vmatprep.subr.bf16.mxu0 0
        %1325 = vmatpush1.bf16.msra.mxu0 0
        %1326 = vmatprep.subr.bf16.mxu0 0
        %1327 = vmatpush1.bf16.msra.mxu0 0
        %1328 = vmatprep.subr.bf16.mxu0 0
        %1329 = vmatpush1.bf16.msra.mxu0 0
        %1330 = vmatprep.subr.bf16.mxu0 0
        %1331 = vmatpush1.bf16.msra.mxu0 0
        %1332 = vmatprep.subr.bf16.mxu0 0
        %1333 = vmatpush1.bf16.msra.mxu0 0
        %1334 = vmatprep.mubr.bf16.mxu0 0
        %1335 = vmatmul.mubr.bf16.gmra.mrb[0].mxu0 %v1229
        %v1336 = vpop.f32.mrb[0].mxu0
        %v1337 = vadd.f32 %v1253, %v1336
        %v1338 = vpop.f32.mrb[0].mxu0
        %v1339 = vpop.f32.mrb[0].mxu0
        %v1340 = vadd.f32 %v1253, %v1339
        %v1341 = vpop.f32.mrb[0].mxu0
        %1342 = vmatprep.mubr.bf16.mxu0 0
        %1343 = vmatmul.mubr.bf16.gmra.mrb[0].mxu0 %v1230
        %v1344 = vpop.f32.mrb[0].mxu0
        %v1345 = vadd.f32 %v1253, %v1344
        %v1346 = vpop.f32.mrb[0].mxu0
        %v1347 = vpop.f32.mrb[0].mxu0
        %v1348 = vadd.f32 %v1253, %v1347
        %v1349 = vpop.f32.mrb[0].mxu0
        %1350 = vmatprep.mubr.bf16.mxu0 0
        %1351 = vmatmul.mubr.bf16.gmra.mrb[0].mxu0 %v1231
        %v1352 = vpop.f32.mrb[0].mxu0
        %v1353 = vadd.f32 %v1253, %v1352
        %v1354 = vpop.f32.mrb[0].mxu0
        %v1355 = vpop.f32.mrb[0].mxu0
        %v1356 = vadd.f32 %v1253, %v1355
        %v1357 = vpop.f32.mrb[0].mxu0
        %1358 = vmatprep.mubr.bf16.mxu0 0
        %1359 = vmatmul.mubr.bf16.gmra.mrb[0].mxu0 %v1232
        %v1360 = vpop.f32.mrb[0].mxu0
        %v1361 = vadd.f32 %v1253, %v1360
        %v1362 = vpop.f32.mrb[0].mxu0
        %v1363 = vpop.f32.mrb[0].mxu0
        %v1364 = vadd.f32 %v1253, %v1363
        %v1365 = vpop.f32.mrb[0].mxu0
        %1366 = vdwg.mxu0
        %v1367 = vmul.f32 %v341, %v1337
        %v1368 = vmul.f32 %v342, %v1340
        %v1369 = vmul.f32 %v343, %v1345
        %v1370 = vmul.f32 %v344, %v1348
        %v1371 = vmul.f32 %v345, %v1353
        %v1372 = vmul.f32 %v346, %v1356
        %v1373 = vmul.f32 %v347, %v1361
        %v1374 = vmul.f32 %v348, %v1364
        %v1375 = vadd.f32 %v1367, %v1217
        %v1376 = vadd.f32 %v1368, %v1218
        %v1377 = vadd.f32 %v1369, %v1219
        %v1378 = vadd.f32 %v1370, %v1220
        %v1379 = vadd.f32 %v1371, %v1221
        %v1380 = vadd.f32 %v1372, %v1222
        %v1381 = vadd.f32 %v1373, %v1223
        %v1382 = vadd.f32 %v1374, %v1224
        %1383 = vadd.xlane.f32.xlu0 %v1375
        %v1384 = vpop.xlane.xlu0 %1383
        %1385 = vadd.xlane.f32.xlu0 %v1376
        %v1386 = vpop.xlane.xlu0 %1385
        %1387 = vadd.xlane.f32.xlu0 %v1377
        %v1388 = vpop.xlane.xlu0 %1387
        %1389 = vadd.xlane.f32.xlu0 %v1378
        %v1390 = vpop.xlane.xlu0 %1389
        %1391 = vadd.xlane.f32.xlu0 %v1379
        %v1392 = vpop.xlane.xlu0 %1391
        %1393 = vadd.xlane.f32.xlu0 %v1380
        %v1394 = vpop.xlane.xlu0 %1393
        %1395 = vadd.xlane.f32.xlu0 %v1381
        %v1396 = vpop.xlane.xlu0 %1395
        %1397 = vadd.xlane.f32.xlu0 %v1382
        %v1398 = vpop.xlane.xlu0 %1397
        %v1399 = vmul.f32 %v1375, %v1375
        %v1400 = vmul.f32 %v1376, %v1376
        %v1401 = vmul.f32 %v1377, %v1377
        %v1402 = vmul.f32 %v1378, %v1378
        %v1403 = vmul.f32 %v1379, %v1379
        %v1404 = vmul.f32 %v1380, %v1380
        %v1405 = vmul.f32 %v1381, %v1381
        %v1406 = vmul.f32 %v1382, %v1382
        %1407 = vadd.xlane.f32.xlu0 %v1399
        %v1408 = vpop.xlane.xlu0 %1407
        %1409 = vadd.xlane.f32.xlu0 %v1400
        %v1410 = vpop.xlane.xlu0 %1409
        %1411 = vadd.xlane.f32.xlu0 %v1401
        %v1412 = vpop.xlane.xlu0 %1411
        %1413 = vadd.xlane.f32.xlu0 %v1402
        %v1414 = vpop.xlane.xlu0 %1413
        %1415 = vadd.xlane.f32.xlu0 %v1403
        %v1416 = vpop.xlane.xlu0 %1415
        %1417 = vadd.xlane.f32.xlu0 %v1404
        %v1418 = vpop.xlane.xlu0 %1417
        %1419 = vadd.xlane.f32.xlu0 %v1405
        %v1420 = vpop.xlane.xlu0 %1419
        %1421 = vadd.xlane.f32.xlu0 %v1406
        %v1422 = vpop.xlane.xlu0 %1421
        %v1423 = vmul.f32 %v1384, 0.0125
        %v1424 = vmul.f32 %v1386, 0.0125
        %v1425 = vmul.f32 %v1388, 0.0125
        %v1426 = vmul.f32 %v1390, 0.0125
        %v1427 = vmul.f32 %v1392, 0.0125
        %v1428 = vmul.f32 %v1394, 0.0125
        %v1429 = vmul.f32 %v1396, 0.0125
        %v1430 = vmul.f32 %v1398, 0.0125
        %v1431 = vmul.f32 %v1408, 0.0125
        %v1432 = vmul.f32 %v1410, 0.0125
        %v1433 = vmul.f32 %v1412, 0.0125
        %v1434 = vmul.f32 %v1414, 0.0125
        %v1435 = vmul.f32 %v1416, 0.0125
        %v1436 = vmul.f32 %v1418, 0.0125
        %v1437 = vmul.f32 %v1420, 0.0125
        %v1438 = vmul.f32 %v1422, 0.0125
        %v1439 = vmul.f32 %v1423, %v1423
        %v1440 = vmul.f32 %v1424, %v1424
        %v1441 = vmul.f32 %v1425, %v1425
        %v1442 = vmul.f32 %v1426, %v1426
        %v1443 = vmul.f32 %v1427, %v1427
        %v1444 = vmul.f32 %v1428, %v1428
        %v1445 = vmul.f32 %v1429, %v1429
        %v1446 = vmul.f32 %v1430, %v1430
        %v1447 = vsub.f32 %v1431, %v1439
        %v1448 = vsub.f32 %v1432, %v1440
        %v1449 = vsub.f32 %v1433, %v1441
        %v1450 = vsub.f32 %v1434, %v1442
        %v1451 = vsub.f32 %v1435, %v1443
        %v1452 = vsub.f32 %v1436, %v1444
        %v1453 = vsub.f32 %v1437, %v1445
        %v1454 = vsub.f32 %v1438, %v1446
        %v1455 = vadd.f32 %v1447, 1e-05
        %v1456 = vadd.f32 %v1448, 1e-05
        %v1457 = vadd.f32 %v1449, 1e-05
        %v1458 = vadd.f32 %v1450, 1e-05
        %v1459 = vadd.f32 %v1451, 1e-05
        %v1460 = vadd.f32 %v1452, 1e-05
        %v1461 = vadd.f32 %v1453, 1e-05
        %v1462 = vadd.f32 %v1454, 1e-05
        %v1463 = vrsqrt.pop %v1455
        %v1464 = vrsqrt.pop %v1456
        %v1465 = vrsqrt.pop %v1457
        %v1466 = vrsqrt.pop %v1458
        %v1467 = vrsqrt.pop %v1459
        %v1468 = vrsqrt.pop %v1460
        %v1469 = vrsqrt.pop %v1461
        %v1470 = vrsqrt.pop %v1462
        %v1471 = vsub.f32 %v1375, %v1423
        %v1472 = vsub.f32 %v1376, %v1424
        %v1473 = vsub.f32 %v1377, %v1425
        %v1474 = vsub.f32 %v1378, %v1426
        %v1475 = vsub.f32 %v1379, %v1427
        %v1476 = vsub.f32 %v1380, %v1428
        %v1477 = vsub.f32 %v1381, %v1429
        %v1478 = vsub.f32 %v1382, %v1430
        %v1479 = vmul.f32 %v1471, %v1463
        %v1480 = vmul.f32 %v1472, %v1464
        %v1481 = vmul.f32 %v1473, %v1465
        %v1482 = vmul.f32 %v1474, %v1466
        %v1483 = vmul.f32 %v1475, %v1467
        %v1484 = vmul.f32 %v1476, %v1468
        %v1485 = vmul.f32 %v1477, %v1469
        %v1486 = vmul.f32 %v1478, %v1470
        %v1487 = vlaneseq
        %v1488 = vshrl.u32 %v1487, 7
        %v1489 = vsub.s32 0, %v1488
        %v1490 = vrot.slane %v1227, %v1489
        %v1491 = vmul.f32 %v1479, %v1490
        %v1492 = vmul.f32 %v1480, %v1490
        %v1493 = vmul.f32 %v1481, %v1490
        %v1494 = vmul.f32 %v1482, %v1490
        %v1495 = vmul.f32 %v1483, %v1490
        %v1496 = vmul.f32 %v1484, %v1490
        %v1497 = vmul.f32 %v1485, %v1490
        %v1498 = vmul.f32 %v1486, %v1490
        %v1499 = vlaneseq
        %v1500 = vshrl.u32 %v1499, 7
        %v1501 = vsub.s32 0, %v1500
        %v1502 = vrot.slane %v1228, %v1501
        %v1503 = vadd.f32 %v1491, %v1502
        %v1504 = vadd.f32 %v1492, %v1502
        %v1505 = vadd.f32 %v1493, %v1502
        %v1506 = vadd.f32 %v1494, %v1502
        %v1507 = vadd.f32 %v1495, %v1502
        %v1508 = vadd.f32 %v1496, %v1502
        %v1509 = vadd.f32 %v1497, %v1502
        %v1510 = vadd.f32 %v1498, %v1502
        %s1511 = scalar_lea.vmem [#allocation6], 16
        %v1512 = vld [vmem:[%s1511] sm:$0x1]
        %v1513 = vld [vmem:[%s1511 + $0x1] sm:$0x1]
        %v1514 = vld [vmem:[%s1511 + $0x2] sm:$0x1]
        %v1515 = vpack.c.bf16 %v1504, %v1503
        %v1516 = vpack.c.bf16 %v1506, %v1505
        %v1517 = vpack.c.bf16 %v1508, %v1507
        %v1518 = vpack.c.bf16 %v1510, %v1509
        %s1519 = scalar_lea.vmem [#allocation4], 256
        %v1520 = vld [vmem:[%s1519] sm:$0xf]
        %v1521 = vld [vmem:[%s1519 + $0x4] sm:$0xf]
        %v1522 = vld [vmem:[%s1519 + $0x8] sm:$0xf]
        %v1523 = vld [vmem:[%s1519 + $0xc] sm:$0xf]
        %v1524 = vld [vmem:[%s1519 + $0x10] sm:$0xf]
        %v1525 = vld [vmem:[%s1519 + $0x14] sm:$0xf]
        %v1526 = vld [vmem:[%s1519 + $0x18] sm:$0xf]
        %v1527 = vld [vmem:[%s1519 + $0x1c] sm:$0xf]
        %v1528 = vld [vmem:[%s1519 + $0x20] sm:$0xf]
        %v1529 = vld [vmem:[%s1519 + $0x24] sm:$0xf]
        %v1530 = vld [vmem:[%s1519 + $0x28] sm:$0xf]
        %v1531 = vld [vmem:[%s1519 + $0x2c] sm:$0xf]
        %v1532 = vld [vmem:[%s1519 + $0x30] sm:$0xf]
        %v1533 = vld [vmem:[%s1519 + $0x34] sm:$0xf]
        %v1534 = vld [vmem:[%s1519 + $0x38] sm:$0xf]
        %v1535 = vld [vmem:[%s1519 + $0x3c] sm:$0xf]
        %v1536 = vlaneseq
        %v1537 = vshrl.u32 %v1536, 7
        %v1538 = vsub.s32 0, %v1537
        %v1539 = vrot.slane %v1512, %v1538
        %v1556 = vunpack.c.l.b16 %v1520
        %v1557 = vunpack.c.l.b16 %v1521
        %v1558 = vunpack.c.l.b16 %v1522
        %v1559 = vunpack.c.l.b16 %v1523
        %v1560 = vunpack.c.l.b16 %v1524
        %v1561 = vunpack.c.l.b16 %v1525
        %v1562 = vunpack.c.l.b16 %v1526
        %v1563 = vunpack.c.l.b16 %v1527
        %v1564 = vunpack.c.l.b16 %v1528
        %v1565 = vunpack.c.l.b16 %v1529
        %v1566 = vunpack.c.l.b16 %v1530
        %v1567 = vunpack.c.l.b16 %v1531
        %v1568 = vunpack.c.l.b16 %v1532
        %v1569 = vunpack.c.l.b16 %v1533
        %v1570 = vunpack.c.l.b16 %v1534
        %v1571 = vunpack.c.l.b16 %v1535
        %v1572 = vpack.c.b16 %v1557, %v1556
        %v1573 = vpack.c.b16 %v1559, %v1558
        %v1574 = vpack.c.b16 %v1561, %v1560
        %v1575 = vpack.c.b16 %v1563, %v1562
        %v1576 = vpack.c.b16 %v1565, %v1564
        %v1577 = vpack.c.b16 %v1567, %v1566
        %v1578 = vpack.c.b16 %v1569, %v1568
        %v1579 = vpack.c.b16 %v1571, %v1570
        %1588 = vmatprep.subr.bf16.mxu0 0
        %1589 = vmatpush1.bf16.msra.mxu0 %v1572
        %1590 = vmatprep.subr.bf16.mxu0 0
        %1591 = vmatpush1.bf16.msra.mxu0 %v1573
        %1592 = vmatprep.subr.bf16.mxu0 0
        %1593 = vmatpush1.bf16.msra.mxu0 %v1574
        %1594 = vmatprep.subr.bf16.mxu0 0
        %1595 = vmatpush1.bf16.msra.mxu0 %v1575
        %1596 = vmatprep.subr.bf16.mxu0 0
        %1597 = vmatpush1.bf16.msra.mxu0 %v1576
        %1598 = vmatprep.subr.bf16.mxu0 0
        %1599 = vmatpush1.bf16.msra.mxu0 %v1577
        %1600 = vmatprep.subr.bf16.mxu0 0
        %1601 = vmatpush1.bf16.msra.mxu0 %v1578
        %1602 = vmatprep.subr.bf16.mxu0 0
        %1603 = vmatpush1.bf16.msra.mxu0 %v1579
        %1604 = vmatprep.subr.bf16.mxu0 0
        %1605 = vmatpush1.bf16.msra.mxu0 0
        %1606 = vmatprep.subr.bf16.mxu0 0
        %1607 = vmatpush1.bf16.msra.mxu0 0
        %1608 = vmatprep.subr.bf16.mxu0 0
        %1609 = vmatpush1.bf16.msra.mxu0 0
        %1610 = vmatprep.subr.bf16.mxu0 0
        %1611 = vmatpush1.bf16.msra.mxu0 0
        %1612 = vmatprep.subr.bf16.mxu0 0
        %1613 = vmatpush1.bf16.msra.mxu0 0
        %1614 = vmatprep.subr.bf16.mxu0 0
        %1615 = vmatpush1.bf16.msra.mxu0 0
        %1616 = vmatprep.subr.bf16.mxu0 0
        %1617 = vmatpush1.bf16.msra.mxu0 0
        %1618 = vmatprep.subr.bf16.mxu0 0
        %1619 = vmatpush1.bf16.msra.mxu0 0
        %1620 = vmatprep.mubr.bf16.mxu0 0
        %1621 = vmatmul.mubr.bf16.gmra.mrb[0].mxu0 %v1515
        %v1622 = vpop.f32.mrb[0].mxu0
        %v1623 = vadd.f32 %v1539, %v1622
        %v1624 = vpop.f32.mrb[0].mxu0
        %v1625 = vpop.f32.mrb[0].mxu0
        %v1626 = vadd.f32 %v1539, %v1625
        %v1627 = vpop.f32.mrb[0].mxu0
        %1628 = vmatprep.mubr.bf16.mxu0 0
        %1629 = vmatmul.mubr.bf16.gmra.mrb[0].mxu0 %v1516
        %v1630 = vpop.f32.mrb[0].mxu0
        %v1631 = vadd.f32 %v1539, %v1630
        %v1632 = vpop.f32.mrb[0].mxu0
        %v1633 = vpop.f32.mrb[0].mxu0
        %v1634 = vadd.f32 %v1539, %v1633
        %v1635 = vpop.f32.mrb[0].mxu0
        %1636 = vmatprep.mubr.bf16.mxu0 0
        %1637 = vmatmul.mubr.bf16.gmra.mrb[0].mxu0 %v1517
        %v1638 = vpop.f32.mrb[0].mxu0
        %v1639 = vadd.f32 %v1539, %v1638
        %v1640 = vpop.f32.mrb[0].mxu0
        %v1641 = vpop.f32.mrb[0].mxu0
        %v1642 = vadd.f32 %v1539, %v1641
        %v1643 = vpop.f32.mrb[0].mxu0
        %1644 = vmatprep.mubr.bf16.mxu0 0
        %1645 = vmatmul.mubr.bf16.gmra.mrb[0].mxu0 %v1518
        %v1646 = vpop.f32.mrb[0].mxu0
        %v1647 = vadd.f32 %v1539, %v1646
        %v1648 = vpop.f32.mrb[0].mxu0
        %v1649 = vpop.f32.mrb[0].mxu0
        %v1650 = vadd.f32 %v1539, %v1649
        %v1651 = vpop.f32.mrb[0].mxu0
        %1652 = vdwg.mxu0
        %v1653 = vmul.f32 %v341, %v1623
        %v1654 = vmul.f32 %v342, %v1626
        %v1655 = vmul.f32 %v343, %v1631
        %v1656 = vmul.f32 %v344, %v1634
        %v1657 = vmul.f32 %v345, %v1639
        %v1658 = vmul.f32 %v346, %v1642
        %v1659 = vmul.f32 %v347, %v1647
        %v1660 = vmul.f32 %v348, %v1650
        %v1661 = vadd.f32 %v1653, %v1503
        %v1662 = vadd.f32 %v1654, %v1504
        %v1663 = vadd.f32 %v1655, %v1505
        %v1664 = vadd.f32 %v1656, %v1506
        %v1665 = vadd.f32 %v1657, %v1507
        %v1666 = vadd.f32 %v1658, %v1508
        %v1667 = vadd.f32 %v1659, %v1509
        %v1668 = vadd.f32 %v1660, %v1510
        %1669 = vadd.xlane.f32.xlu0 %v1661
        %v1670 = vpop.xlane.xlu0 %1669
        %1671 = vadd.xlane.f32.xlu0 %v1662
        %v1672 = vpop.xlane.xlu0 %1671
        %1673 = vadd.xlane.f32.xlu0 %v1663
        %v1674 = vpop.xlane.xlu0 %1673
        %1675 = vadd.xlane.f32.xlu0 %v1664
        %v1676 = vpop.xlane.xlu0 %1675
        %1677 = vadd.xlane.f32.xlu0 %v1665
        %v1678 = vpop.xlane.xlu0 %1677
        %1679 = vadd.xlane.f32.xlu0 %v1666
        %v1680 = vpop.xlane.xlu0 %1679
        %1681 = vadd.xlane.f32.xlu0 %v1667
        %v1682 = vpop.xlane.xlu0 %1681
        %1683 = vadd.xlane.f32.xlu0 %v1668
        %v1684 = vpop.xlane.xlu0 %1683
        %v1685 = vmul.f32 %v1661, %v1661
        %v1686 = vmul.f32 %v1662, %v1662
        %v1687 = vmul.f32 %v1663, %v1663
        %v1688 = vmul.f32 %v1664, %v1664
        %v1689 = vmul.f32 %v1665, %v1665
        %v1690 = vmul.f32 %v1666, %v1666
        %v1691 = vmul.f32 %v1667, %v1667
        %v1692 = vmul.f32 %v1668, %v1668
        %1693 = vadd.xlane.f32.xlu0 %v1685
        %v1694 = vpop.xlane.xlu0 %1693
        %1695 = vadd.xlane.f32.xlu0 %v1686
        %v1696 = vpop.xlane.xlu0 %1695
        %1697 = vadd.xlane.f32.xlu0 %v1687
        %v1698 = vpop.xlane.xlu0 %1697
        %1699 = vadd.xlane.f32.xlu0 %v1688
        %v1700 = vpop.xlane.xlu0 %1699
        %1701 = vadd.xlane.f32.xlu0 %v1689
        %v1702 = vpop.xlane.xlu0 %1701
        %1703 = vadd.xlane.f32.xlu0 %v1690
        %v1704 = vpop.xlane.xlu0 %1703
        %1705 = vadd.xlane.f32.xlu0 %v1691
        %v1706 = vpop.xlane.xlu0 %1705
        %1707 = vadd.xlane.f32.xlu0 %v1692
        %v1708 = vpop.xlane.xlu0 %1707
        %v1709 = vmul.f32 %v1670, 0.0125
        %v1710 = vmul.f32 %v1672, 0.0125
        %v1711 = vmul.f32 %v1674, 0.0125
        %v1712 = vmul.f32 %v1676, 0.0125
        %v1713 = vmul.f32 %v1678, 0.0125
        %v1714 = vmul.f32 %v1680, 0.0125
        %v1715 = vmul.f32 %v1682, 0.0125
        %v1716 = vmul.f32 %v1684, 0.0125
        %v1717 = vmul.f32 %v1694, 0.0125
        %v1718 = vmul.f32 %v1696, 0.0125
        %v1719 = vmul.f32 %v1698, 0.0125
        %v1720 = vmul.f32 %v1700, 0.0125
        %v1721 = vmul.f32 %v1702, 0.0125
        %v1722 = vmul.f32 %v1704, 0.0125
        %v1723 = vmul.f32 %v1706, 0.0125
        %v1724 = vmul.f32 %v1708, 0.0125
        %v1725 = vmul.f32 %v1709, %v1709
        %v1726 = vmul.f32 %v1710, %v1710
        %v1727 = vmul.f32 %v1711, %v1711
        %v1728 = vmul.f32 %v1712, %v1712
        %v1729 = vmul.f32 %v1713, %v1713
        %v1730 = vmul.f32 %v1714, %v1714
        %v1731 = vmul.f32 %v1715, %v1715
        %v1732 = vmul.f32 %v1716, %v1716
        %v1733 = vsub.f32 %v1717, %v1725
        %v1734 = vsub.f32 %v1718, %v1726
        %v1735 = vsub.f32 %v1719, %v1727
        %v1736 = vsub.f32 %v1720, %v1728
        %v1737 = vsub.f32 %v1721, %v1729
        %v1738 = vsub.f32 %v1722, %v1730
        %v1739 = vsub.f32 %v1723, %v1731
        %v1740 = vsub.f32 %v1724, %v1732
        %v1741 = vadd.f32 %v1733, 1e-05
        %v1742 = vadd.f32 %v1734, 1e-05
        %v1743 = vadd.f32 %v1735, 1e-05
        %v1744 = vadd.f32 %v1736, 1e-05
        %v1745 = vadd.f32 %v1737, 1e-05
        %v1746 = vadd.f32 %v1738, 1e-05
        %v1747 = vadd.f32 %v1739, 1e-05
        %v1748 = vadd.f32 %v1740, 1e-05
        %v1749 = vrsqrt.pop %v1741
        %v1750 = vrsqrt.pop %v1742
        %v1751 = vrsqrt.pop %v1743
        %v1752 = vrsqrt.pop %v1744
        %v1753 = vrsqrt.pop %v1745
        %v1754 = vrsqrt.pop %v1746
        %v1755 = vrsqrt.pop %v1747
        %v1756 = vrsqrt.pop %v1748
        %v1757 = vsub.f32 %v1661, %v1709
        %v1758 = vsub.f32 %v1662, %v1710
        %v1759 = vsub.f32 %v1663, %v1711
        %v1760 = vsub.f32 %v1664, %v1712
        %v1761 = vsub.f32 %v1665, %v1713
        %v1762 = vsub.f32 %v1666, %v1714
        %v1763 = vsub.f32 %v1667, %v1715
        %v1764 = vsub.f32 %v1668, %v1716
        %v1765 = vmul.f32 %v1757, %v1749
        %v1766 = vmul.f32 %v1758, %v1750
        %v1767 = vmul.f32 %v1759, %v1751
        %v1768 = vmul.f32 %v1760, %v1752
        %v1769 = vmul.f32 %v1761, %v1753
        %v1770 = vmul.f32 %v1762, %v1754
        %v1771 = vmul.f32 %v1763, %v1755
        %v1772 = vmul.f32 %v1764, %v1756
        %v1773 = vlaneseq
        %v1774 = vshrl.u32 %v1773, 7
        %v1775 = vsub.s32 0, %v1774
        %v1776 = vrot.slane %v1513, %v1775
        %v1777 = vmul.f32 %v1765, %v1776
        %v1778 = vmul.f32 %v1766, %v1776
        %v1779 = vmul.f32 %v1767, %v1776
        %v1780 = vmul.f32 %v1768, %v1776
        %v1781 = vmul.f32 %v1769, %v1776
        %v1782 = vmul.f32 %v1770, %v1776
        %v1783 = vmul.f32 %v1771, %v1776
        %v1784 = vmul.f32 %v1772, %v1776
        %v1785 = vlaneseq
        %v1786 = vshrl.u32 %v1785, 7
        %v1787 = vsub.s32 0, %v1786
        %v1788 = vrot.slane %v1514, %v1787
        %v1789 = vadd.f32 %v1777, %v1788
        %v1790 = vadd.f32 %v1778, %v1788
        %v1791 = vadd.f32 %v1779, %v1788
        %v1792 = vadd.f32 %v1780, %v1788
        %v1793 = vadd.f32 %v1781, %v1788
        %v1794 = vadd.f32 %v1782, %v1788
        %v1795 = vadd.f32 %v1783, %v1788
        %v1796 = vadd.f32 %v1784, %v1788
        %s1797 = scalar_lea.vmem [#allocation6], 20
        %v1798 = vld [vmem:[%s1797] sm:$0x1]
        %v1799 = vld [vmem:[%s1797 + $0x1] sm:$0x1]
        %v1800 = vld [vmem:[%s1797 + $0x2] sm:$0x1]
        %v1801 = vpack.c.bf16 %v1790, %v1789
        %v1802 = vpack.c.bf16 %v1792, %v1791
        %v1803 = vpack.c.bf16 %v1794, %v1793
        %v1804 = vpack.c.bf16 %v1796, %v1795
        %s1805 = scalar_lea.vmem [#allocation4], 320
        %v1806 = vld [vmem:[%s1805] sm:$0xf]
        %v1807 = vld [vmem:[%s1805 + $0x4] sm:$0xf]
        %v1808 = vld [vmem:[%s1805 + $0x8] sm:$0xf]
        %v1809 = vld [vmem:[%s1805 + $0xc] sm:$0xf]
        %v1810 = vld [vmem:[%s1805 + $0x10] sm:$0xf]
        %v1811 = vld [vmem:[%s1805 + $0x14] sm:$0xf]
        %v1812 = vld [vmem:[%s1805 + $0x18] sm:$0xf]
        %v1813 = vld [vmem:[%s1805 + $0x1c] sm:$0xf]
        %v1814 = vld [vmem:[%s1805 + $0x20] sm:$0xf]
        %v1815 = vld [vmem:[%s1805 + $0x24] sm:$0xf]
        %v1816 = vld [vmem:[%s1805 + $0x28] sm:$0xf]
        %v1817 = vld [vmem:[%s1805 + $0x2c] sm:$0xf]
        %v1818 = vld [vmem:[%s1805 + $0x30] sm:$0xf]
        %v1819 = vld [vmem:[%s1805 + $0x34] sm:$0xf]
        %v1820 = vld [vmem:[%s1805 + $0x38] sm:$0xf]
        %v1821 = vld [vmem:[%s1805 + $0x3c] sm:$0xf]
        %v1822 = vlaneseq
        %v1823 = vshrl.u32 %v1822, 7
        %v1824 = vsub.s32 0, %v1823
        %v1825 = vrot.slane %v1798, %v1824
        %v1842 = vunpack.c.l.b16 %v1806
        %v1843 = vunpack.c.l.b16 %v1807
        %v1844 = vunpack.c.l.b16 %v1808
        %v1845 = vunpack.c.l.b16 %v1809
        %v1846 = vunpack.c.l.b16 %v1810
        %v1847 = vunpack.c.l.b16 %v1811
        %v1848 = vunpack.c.l.b16 %v1812
        %v1849 = vunpack.c.l.b16 %v1813
        %v1850 = vunpack.c.l.b16 %v1814
        %v1851 = vunpack.c.l.b16 %v1815
        %v1852 = vunpack.c.l.b16 %v1816
        %v1853 = vunpack.c.l.b16 %v1817
        %v1854 = vunpack.c.l.b16 %v1818
        %v1855 = vunpack.c.l.b16 %v1819
        %v1856 = vunpack.c.l.b16 %v1820
        %v1857 = vunpack.c.l.b16 %v1821
        %v1858 = vpack.c.b16 %v1843, %v1842
        %v1859 = vpack.c.b16 %v1845, %v1844
        %v1860 = vpack.c.b16 %v1847, %v1846
        %v1861 = vpack.c.b16 %v1849, %v1848
        %v1862 = vpack.c.b16 %v1851, %v1850
        %v1863 = vpack.c.b16 %v1853, %v1852
        %v1864 = vpack.c.b16 %v1855, %v1854
        %v1865 = vpack.c.b16 %v1857, %v1856
        %1874 = vmatprep.subr.bf16.mxu0 0
        %1875 = vmatpush1.bf16.msra.mxu0 %v1858
        %1876 = vmatprep.subr.bf16.mxu0 0
        %1877 = vmatpush1.bf16.msra.mxu0 %v1859
        %1878 = vmatprep.subr.bf16.mxu0 0
        %1879 = vmatpush1.bf16.msra.mxu0 %v1860
        %1880 = vmatprep.subr.bf16.mxu0 0
        %1881 = vmatpush1.bf16.msra.mxu0 %v1861
        %1882 = vmatprep.subr.bf16.mxu0 0
        %1883 = vmatpush1.bf16.msra.mxu0 %v1862
        %1884 = vmatprep.subr.bf16.mxu0 0
        %1885 = vmatpush1.bf16.msra.mxu0 %v1863
        %1886 = vmatprep.subr.bf16.mxu0 0
        %1887 = vmatpush1.bf16.msra.mxu0 %v1864
        %1888 = vmatprep.subr.bf16.mxu0 0
        %1889 = vmatpush1.bf16.msra.mxu0 %v1865
        %1890 = vmatprep.subr.bf16.mxu0 0
        %1891 = vmatpush1.bf16.msra.mxu0 0
        %1892 = vmatprep.subr.bf16.mxu0 0
        %1893 = vmatpush1.bf16.msra.mxu0 0
        %1894 = vmatprep.subr.bf16.mxu0 0
        %1895 = vmatpush1.bf16.msra.mxu0 0
        %1896 = vmatprep.subr.bf16.mxu0 0
        %1897 = vmatpush1.bf16.msra.mxu0 0
        %1898 = vmatprep.subr.bf16.mxu0 0
        %1899 = vmatpush1.bf16.msra.mxu0 0
        %1900 = vmatprep.subr.bf16.mxu0 0
        %1901 = vmatpush1.bf16.msra.mxu0 0
        %1902 = vmatprep.subr.bf16.mxu0 0
        %1903 = vmatpush1.bf16.msra.mxu0 0
        %1904 = vmatprep.subr.bf16.mxu0 0
        %1905 = vmatpush1.bf16.msra.mxu0 0
        %1906 = vmatprep.mubr.bf16.mxu0 0
        %1907 = vmatmul.mubr.bf16.gmra.mrb[0].mxu0 %v1801
        %v1908 = vpop.f32.mrb[0].mxu0
        %v1909 = vadd.f32 %v1825, %v1908
        %v1910 = vpop.f32.mrb[0].mxu0
        %v1911 = vpop.f32.mrb[0].mxu0
        %v1912 = vadd.f32 %v1825, %v1911
        %v1913 = vpop.f32.mrb[0].mxu0
        %1914 = vmatprep.mubr.bf16.mxu0 0
        %1915 = vmatmul.mubr.bf16.gmra.mrb[0].mxu0 %v1802
        %v1916 = vpop.f32.mrb[0].mxu0
        %v1917 = vadd.f32 %v1825, %v1916
        %v1918 = vpop.f32.mrb[0].mxu0
        %v1919 = vpop.f32.mrb[0].mxu0
        %v1920 = vadd.f32 %v1825, %v1919
        %v1921 = vpop.f32.mrb[0].mxu0
        %1922 = vmatprep.mubr.bf16.mxu0 0
        %1923 = vmatmul.mubr.bf16.gmra.mrb[0].mxu0 %v1803
        %v1924 = vpop.f32.mrb[0].mxu0
        %v1925 = vadd.f32 %v1825, %v1924
        %v1926 = vpop.f32.mrb[0].mxu0
        %v1927 = vpop.f32.mrb[0].mxu0
        %v1928 = vadd.f32 %v1825, %v1927
        %v1929 = vpop.f32.mrb[0].mxu0
        %1930 = vmatprep.mubr.bf16.mxu0 0
        %1931 = vmatmul.mubr.bf16.gmra.mrb[0].mxu0 %v1804
        %v1932 = vpop.f32.mrb[0].mxu0
        %v1933 = vadd.f32 %v1825, %v1932
        %v1934 = vpop.f32.mrb[0].mxu0
        %v1935 = vpop.f32.mrb[0].mxu0
        %v1936 = vadd.f32 %v1825, %v1935
        %v1937 = vpop.f32.mrb[0].mxu0
        %1938 = vdwg.mxu0
        %v1939 = vmul.f32 %v341, %v1909
        %v1940 = vmul.f32 %v342, %v1912
        %v1941 = vmul.f32 %v343, %v1917
        %v1942 = vmul.f32 %v344, %v1920
        %v1943 = vmul.f32 %v345, %v1925
        %v1944 = vmul.f32 %v346, %v1928
        %v1945 = vmul.f32 %v347, %v1933
        %v1946 = vmul.f32 %v348, %v1936
        %v1947 = vadd.f32 %v1939, %v1789
        %v1948 = vadd.f32 %v1940, %v1790
        %v1949 = vadd.f32 %v1941, %v1791
        %v1950 = vadd.f32 %v1942, %v1792
        %v1951 = vadd.f32 %v1943, %v1793
        %v1952 = vadd.f32 %v1944, %v1794
        %v1953 = vadd.f32 %v1945, %v1795
        %v1954 = vadd.f32 %v1946, %v1796
        %1955 = vadd.xlane.f32.xlu0 %v1947
        %v1956 = vpop.xlane.xlu0 %1955
        %1957 = vadd.xlane.f32.xlu0 %v1948
        %v1958 = vpop.xlane.xlu0 %1957
        %1959 = vadd.xlane.f32.xlu0 %v1949
        %v1960 = vpop.xlane.xlu0 %1959
        %1961 = vadd.xlane.f32.xlu0 %v1950
        %v1962 = vpop.xlane.xlu0 %1961
        %1963 = vadd.xlane.f32.xlu0 %v1951
        %v1964 = vpop.xlane.xlu0 %1963
        %1965 = vadd.xlane.f32.xlu0 %v1952
        %v1966 = vpop.xlane.xlu0 %1965
        %1967 = vadd.xlane.f32.xlu0 %v1953
        %v1968 = vpop.xlane.xlu0 %1967
        %1969 = vadd.xlane.f32.xlu0 %v1954
        %v1970 = vpop.xlane.xlu0 %1969
        %v1971 = vmul.f32 %v1947, %v1947
        %v1972 = vmul.f32 %v1948, %v1948
        %v1973 = vmul.f32 %v1949, %v1949
        %v1974 = vmul.f32 %v1950, %v1950
        %v1975 = vmul.f32 %v1951, %v1951
        %v1976 = vmul.f32 %v1952, %v1952
        %v1977 = vmul.f32 %v1953, %v1953
        %v1978 = vmul.f32 %v1954, %v1954
        %1979 = vadd.xlane.f32.xlu0 %v1971
        %v1980 = vpop.xlane.xlu0 %1979
        %1981 = vadd.xlane.f32.xlu0 %v1972
        %v1982 = vpop.xlane.xlu0 %1981
        %1983 = vadd.xlane.f32.xlu0 %v1973
        %v1984 = vpop.xlane.xlu0 %1983
        %1985 = vadd.xlane.f32.xlu0 %v1974
        %v1986 = vpop.xlane.xlu0 %1985
        %1987 = vadd.xlane.f32.xlu0 %v1975
        %v1988 = vpop.xlane.xlu0 %1987
        %1989 = vadd.xlane.f32.xlu0 %v1976
        %v1990 = vpop.xlane.xlu0 %1989
        %1991 = vadd.xlane.f32.xlu0 %v1977
        %v1992 = vpop.xlane.xlu0 %1991
        %1993 = vadd.xlane.f32.xlu0 %v1978
        %v1994 = vpop.xlane.xlu0 %1993
        %v1995 = vmul.f32 %v1956, 0.0125
        %v1996 = vmul.f32 %v1958, 0.0125
        %v1997 = vmul.f32 %v1960, 0.0125
        %v1998 = vmul.f32 %v1962, 0.0125
        %v1999 = vmul.f32 %v1964, 0.0125
        %v2000 = vmul.f32 %v1966, 0.0125
        %v2001 = vmul.f32 %v1968, 0.0125
        %v2002 = vmul.f32 %v1970, 0.0125
        %v2003 = vmul.f32 %v1980, 0.0125
        %v2004 = vmul.f32 %v1982, 0.0125
        %v2005 = vmul.f32 %v1984, 0.0125
        %v2006 = vmul.f32 %v1986, 0.0125
        %v2007 = vmul.f32 %v1988, 0.0125
        %v2008 = vmul.f32 %v1990, 0.0125
        %v2009 = vmul.f32 %v1992, 0.0125
        %v2010 = vmul.f32 %v1994, 0.0125
        %v2011 = vmul.f32 %v1995, %v1995
        %v2012 = vmul.f32 %v1996, %v1996
        %v2013 = vmul.f32 %v1997, %v1997
        %v2014 = vmul.f32 %v1998, %v1998
        %v2015 = vmul.f32 %v1999, %v1999
        %v2016 = vmul.f32 %v2000, %v2000
        %v2017 = vmul.f32 %v2001, %v2001
        %v2018 = vmul.f32 %v2002, %v2002
        %v2019 = vsub.f32 %v2003, %v2011
        %v2020 = vsub.f32 %v2004, %v2012
        %v2021 = vsub.f32 %v2005, %v2013
        %v2022 = vsub.f32 %v2006, %v2014
        %v2023 = vsub.f32 %v2007, %v2015
        %v2024 = vsub.f32 %v2008, %v2016
        %v2025 = vsub.f32 %v2009, %v2017
        %v2026 = vsub.f32 %v2010, %v2018
        %v2027 = vadd.f32 %v2019, 1e-05
        %v2028 = vadd.f32 %v2020, 1e-05
        %v2029 = vadd.f32 %v2021, 1e-05
        %v2030 = vadd.f32 %v2022, 1e-05
        %v2031 = vadd.f32 %v2023, 1e-05
        %v2032 = vadd.f32 %v2024, 1e-05
        %v2033 = vadd.f32 %v2025, 1e-05
        %v2034 = vadd.f32 %v2026, 1e-05
        %v2035 = vrsqrt.pop %v2027
        %v2036 = vrsqrt.pop %v2028
        %v2037 = vrsqrt.pop %v2029
        %v2038 = vrsqrt.pop %v2030
        %v2039 = vrsqrt.pop %v2031
        %v2040 = vrsqrt.pop %v2032
        %v2041 = vrsqrt.pop %v2033
        %v2042 = vrsqrt.pop %v2034
        %v2043 = vsub.f32 %v1947, %v1995
        %v2044 = vsub.f32 %v1948, %v1996
        %v2045 = vsub.f32 %v1949, %v1997
        %v2046 = vsub.f32 %v1950, %v1998
        %v2047 = vsub.f32 %v1951, %v1999
        %v2048 = vsub.f32 %v1952, %v2000
        %v2049 = vsub.f32 %v1953, %v2001
        %v2050 = vsub.f32 %v1954, %v2002
        %v2051 = vmul.f32 %v2043, %v2035
        %v2052 = vmul.f32 %v2044, %v2036
        %v2053 = vmul.f32 %v2045, %v2037
        %v2054 = vmul.f32 %v2046, %v2038
        %v2055 = vmul.f32 %v2047, %v2039
        %v2056 = vmul.f32 %v2048, %v2040
        %v2057 = vmul.f32 %v2049, %v2041
        %v2058 = vmul.f32 %v2050, %v2042
        %v2059 = vlaneseq
        %v2060 = vshrl.u32 %v2059, 7
        %v2061 = vsub.s32 0, %v2060
        %v2062 = vrot.slane %v1799, %v2061
        %v2063 = vmul.f32 %v2051, %v2062
        %v2064 = vmul.f32 %v2052, %v2062
        %v2065 = vmul.f32 %v2053, %v2062
        %v2066 = vmul.f32 %v2054, %v2062
        %v2067 = vmul.f32 %v2055, %v2062
        %v2068 = vmul.f32 %v2056, %v2062
        %v2069 = vmul.f32 %v2057, %v2062
        %v2070 = vmul.f32 %v2058, %v2062
        %v2071 = vlaneseq
        %v2072 = vshrl.u32 %v2071, 7
        %v2073 = vsub.s32 0, %v2072
        %v2074 = vrot.slane %v1800, %v2073
        %v2075 = vadd.f32 %v2063, %v2074
        %v2076 = vadd.f32 %v2064, %v2074
        %v2077 = vadd.f32 %v2065, %v2074
        %v2078 = vadd.f32 %v2066, %v2074
        %v2079 = vadd.f32 %v2067, %v2074
        %v2080 = vadd.f32 %v2068, %v2074
        %v2081 = vadd.f32 %v2069, %v2074
        %v2082 = vadd.f32 %v2070, %v2074
        %v2083 = vld [vmem:[%s5] sm:$0x1]
        %v2084 = vld [vmem:[%s5 + $0x1] sm:$0x1]
        %v2085 = vld [vmem:[%s5 + $0x2] sm:$0x1]
        %v2086 = vld [vmem:[%s5 + $0x3] sm:$0x1]
        %v2087 = vpack.c.bf16 %v2076, %v2075
        %v2088 = vpack.c.bf16 %v2078, %v2077
        %v2089 = vpack.c.bf16 %v2080, %v2079
        %v2090 = vpack.c.bf16 %v2082, %v2081
        %v2091 = vld [vmem:[#allocation7] sm:$0xf]
        %v2092 = vld [vmem:[#allocation7 + $0x4] sm:$0xf]
        %v2093 = vld [vmem:[#allocation7 + $0x8] sm:$0xf]
        %v2094 = vld [vmem:[#allocation7 + $0xc] sm:$0xf]
        %v2095 = vld [vmem:[#allocation7 + $0x10] sm:$0xf]
        %v2096 = vld [vmem:[#allocation7 + $0x14] sm:$0xf]
        %v2097 = vld [vmem:[#allocation7 + $0x18] sm:$0xf]
        %v2098 = vld [vmem:[#allocation7 + $0x1c] sm:$0xf]
        %v2099 = vld [vmem:[#allocation7 + $0x20] sm:$0xf]
        %v2100 = vld [vmem:[#allocation7 + $0x24] sm:$0xf]
        %v2101 = vld [vmem:[#allocation7 + $0x28] sm:$0xf]
        %v2102 = vld [vmem:[#allocation7 + $0x2c] sm:$0xf]
        %v2103 = vld [vmem:[#allocation7 + $0x30] sm:$0xf]
        %v2104 = vld [vmem:[#allocation7 + $0x34] sm:$0xf]
        %v2105 = vld [vmem:[#allocation7 + $0x38] sm:$0xf]
        %v2106 = vld [vmem:[#allocation7 + $0x3c] sm:$0xf]
        %v2107 = vlaneseq
        %v2108 = vshrl.u32 %v2107, 7
        %v2109 = vsub.s32 0, %v2108
        %v2110 = vrot.slane %v2083, %v2109
        %v2127 = vunpack.c.l.b16 %v2091
        %v2128 = vunpack.c.l.b16 %v2092
        %v2129 = vunpack.c.l.b16 %v2093
        %v2130 = vunpack.c.l.b16 %v2094
        %v2131 = vunpack.c.l.b16 %v2095
        %v2132 = vunpack.c.l.b16 %v2096
        %v2133 = vunpack.c.l.b16 %v2097
        %v2134 = vunpack.c.l.b16 %v2098
        %v2135 = vunpack.c.l.b16 %v2099
        %v2136 = vunpack.c.l.b16 %v2100
        %v2137 = vunpack.c.l.b16 %v2101
        %v2138 = vunpack.c.l.b16 %v2102
        %v2139 = vunpack.c.l.b16 %v2103
        %v2140 = vunpack.c.l.b16 %v2104
        %v2141 = vunpack.c.l.b16 %v2105
        %v2142 = vunpack.c.l.b16 %v2106
        %v2143 = vpack.c.b16 %v2128, %v2127
        %v2144 = vpack.c.b16 %v2130, %v2129
        %v2145 = vpack.c.b16 %v2132, %v2131
        %v2146 = vpack.c.b16 %v2134, %v2133
        %v2147 = vpack.c.b16 %v2136, %v2135
        %v2148 = vpack.c.b16 %v2138, %v2137
        %v2149 = vpack.c.b16 %v2140, %v2139
        %v2150 = vpack.c.b16 %v2142, %v2141
        %2159 = vmatprep.subr.bf16.mxu0 0
        %2160 = vmatpush1.bf16.msra.mxu0 %v2143
        %2161 = vmatprep.subr.bf16.mxu0 0
        %2162 = vmatpush1.bf16.msra.mxu0 %v2144
        %2163 = vmatprep.subr.bf16.mxu0 0
        %2164 = vmatpush1.bf16.msra.mxu0 %v2145
        %2165 = vmatprep.subr.bf16.mxu0 0
        %2166 = vmatpush1.bf16.msra.mxu0 %v2146
        %2167 = vmatprep.subr.bf16.mxu0 0
        %2168 = vmatpush1.bf16.msra.mxu0 %v2147
        %2169 = vmatprep.subr.bf16.mxu0 0
        %2170 = vmatpush1.bf16.msra.mxu0 %v2148
        %2171 = vmatprep.subr.bf16.mxu0 0
        %2172 = vmatpush1.bf16.msra.mxu0 %v2149
        %2173 = vmatprep.subr.bf16.mxu0 0
        %2174 = vmatpush1.bf16.msra.mxu0 %v2150
        %2175 = vmatprep.subr.bf16.mxu0 0
        %2176 = vmatpush1.bf16.msra.mxu0 0
        %2177 = vmatprep.subr.bf16.mxu0 0
        %2178 = vmatpush1.bf16.msra.mxu0 0
        %2179 = vmatprep.subr.bf16.mxu0 0
        %2180 = vmatpush1.bf16.msra.mxu0 0
        %2181 = vmatprep.subr.bf16.mxu0 0
        %2182 = vmatpush1.bf16.msra.mxu0 0
        %2183 = vmatprep.subr.bf16.mxu0 0
        %2184 = vmatpush1.bf16.msra.mxu0 0
        %2185 = vmatprep.subr.bf16.mxu0 0
        %2186 = vmatpush1.bf16.msra.mxu0 0
        %2187 = vmatprep.subr.bf16.mxu0 0
        %2188 = vmatpush1.bf16.msra.mxu0 0
        %2189 = vmatprep.subr.bf16.mxu0 0
        %2190 = vmatpush1.bf16.msra.mxu0 0
        %2191 = vmatprep.mubr.bf16.mxu0 0
        %2192 = vmatmul.mubr.bf16.gmra.mrb[0].mxu0 %v2087
        %v2193 = vpop.f32.mrb[0].mxu0
        %v2194 = vadd.f32 %v2110, %v2193
        %v2195 = vpop.f32.mrb[0].mxu0
        %v2196 = vpop.f32.mrb[0].mxu0
        %v2197 = vadd.f32 %v2110, %v2196
        %v2198 = vpop.f32.mrb[0].mxu0
        %2199 = vmatprep.mubr.bf16.mxu0 0
        %2200 = vmatmul.mubr.bf16.gmra.mrb[0].mxu0 %v2088
        %v2201 = vpop.f32.mrb[0].mxu0
        %v2202 = vadd.f32 %v2110, %v2201
        %v2203 = vpop.f32.mrb[0].mxu0
        %v2204 = vpop.f32.mrb[0].mxu0
        %v2205 = vadd.f32 %v2110, %v2204
        %v2206 = vpop.f32.mrb[0].mxu0
        %2207 = vmatprep.mubr.bf16.mxu0 0
        %2208 = vmatmul.mubr.bf16.gmra.mrb[0].mxu0 %v2089
        %v2209 = vpop.f32.mrb[0].mxu0
        %v2210 = vadd.f32 %v2110, %v2209
        %v2211 = vpop.f32.mrb[0].mxu0
        %v2212 = vpop.f32.mrb[0].mxu0
        %v2213 = vadd.f32 %v2110, %v2212
        %v2214 = vpop.f32.mrb[0].mxu0
        %2215 = vmatprep.mubr.bf16.mxu0 0
        %2216 = vmatmul.mubr.bf16.gmra.mrb[0].mxu0 %v2090
        %v2217 = vpop.f32.mrb[0].mxu0
        %v2218 = vadd.f32 %v2110, %v2217
        %v2219 = vpop.f32.mrb[0].mxu0
        %v2220 = vpop.f32.mrb[0].mxu0
        %v2221 = vadd.f32 %v2110, %v2220
        %v2222 = vpop.f32.mrb[0].mxu0
        %2223 = vdwg.mxu0
        %v2224 = vmax.f32 %v2194, 0.0
        %v2225 = vmax.f32 %v2197, 0.0
        %v2226 = vmax.f32 %v2202, 0.0
        %v2227 = vmax.f32 %v2205, 0.0
        %v2228 = vmax.f32 %v2210, 0.0
        %v2229 = vmax.f32 %v2213, 0.0
        %v2230 = vmax.f32 %v2218, 0.0
        %v2231 = vmax.f32 %v2221, 0.0
        %v2232 = vpack.c.bf16 %v2225, %v2224
        %v2233 = vpack.c.bf16 %v2227, %v2226
        %v2234 = vpack.c.bf16 %v2229, %v2228
        %v2235 = vpack.c.bf16 %v2231, %v2230
        %v2236 = vld [vmem:[#allocation9] sm:$0xf]
        %v2237 = vld [vmem:[#allocation9 + $0x4] sm:$0xf]
        %v2238 = vld [vmem:[#allocation9 + $0x8] sm:$0xf]
        %v2239 = vld [vmem:[#allocation9 + $0xc] sm:$0xf]
        %v2240 = vld [vmem:[#allocation9 + $0x10] sm:$0xf]
        %v2241 = vld [vmem:[#allocation9 + $0x14] sm:$0xf]
        %v2242 = vld [vmem:[#allocation9 + $0x18] sm:$0xf]
        %v2243 = vld [vmem:[#allocation9 + $0x1c] sm:$0xf]
        %v2244 = vld [vmem:[#allocation9 + $0x20] sm:$0xf]
        %v2245 = vld [vmem:[#allocation9 + $0x24] sm:$0xf]
        %v2246 = vld [vmem:[#allocation9 + $0x28] sm:$0xf]
        %v2247 = vld [vmem:[#allocation9 + $0x2c] sm:$0xf]
        %v2248 = vld [vmem:[#allocation9 + $0x30] sm:$0xf]
        %v2249 = vld [vmem:[#allocation9 + $0x34] sm:$0xf]
        %v2250 = vld [vmem:[#allocation9 + $0x38] sm:$0xf]
        %v2251 = vld [vmem:[#allocation9 + $0x3c] sm:$0xf]
        %v2252 = vlaneseq
        %v2253 = vshrl.u32 %v2252, 7
        %v2254 = vsub.s32 0, %v2253
        %v2255 = vrot.slane %v2084, %v2254
        %v2272 = vunpack.c.l.b16 %v2236
        %v2273 = vunpack.c.l.b16 %v2237
        %v2274 = vunpack.c.l.b16 %v2238
        %v2275 = vunpack.c.l.b16 %v2239
        %v2276 = vunpack.c.l.b16 %v2240
        %v2277 = vunpack.c.l.b16 %v2241
        %v2278 = vunpack.c.l.b16 %v2242
        %v2279 = vunpack.c.l.b16 %v2243
        %v2280 = vunpack.c.l.b16 %v2244
        %v2281 = vunpack.c.l.b16 %v2245
        %v2282 = vunpack.c.l.b16 %v2246
        %v2283 = vunpack.c.l.b16 %v2247
        %v2284 = vunpack.c.l.b16 %v2248
        %v2285 = vunpack.c.l.b16 %v2249
        %v2286 = vunpack.c.l.b16 %v2250
        %v2287 = vunpack.c.l.b16 %v2251
        %v2288 = vpack.c.b16 %v2273, %v2272
        %v2289 = vpack.c.b16 %v2275, %v2274
        %v2290 = vpack.c.b16 %v2277, %v2276
        %v2291 = vpack.c.b16 %v2279, %v2278
        %v2292 = vpack.c.b16 %v2281, %v2280
        %v2293 = vpack.c.b16 %v2283, %v2282
        %v2294 = vpack.c.b16 %v2285, %v2284
        %v2295 = vpack.c.b16 %v2287, %v2286
        %2304 = vmatprep.subr.bf16.mxu0 0
        %2305 = vmatpush1.bf16.msra.mxu0 %v2288
        %2306 = vmatprep.subr.bf16.mxu0 0
        %2307 = vmatpush1.bf16.msra.mxu0 %v2289
        %2308 = vmatprep.subr.bf16.mxu0 0
        %2309 = vmatpush1.bf16.msra.mxu0 %v2290
        %2310 = vmatprep.subr.bf16.mxu0 0
        %2311 = vmatpush1.bf16.msra.mxu0 %v2291
        %2312 = vmatprep.subr.bf16.mxu0 0
        %2313 = vmatpush1.bf16.msra.mxu0 %v2292
        %2314 = vmatprep.subr.bf16.mxu0 0
        %2315 = vmatpush1.bf16.msra.mxu0 %v2293
        %2316 = vmatprep.subr.bf16.mxu0 0
        %2317 = vmatpush1.bf16.msra.mxu0 %v2294
        %2318 = vmatprep.subr.bf16.mxu0 0
        %2319 = vmatpush1.bf16.msra.mxu0 %v2295
        %2320 = vmatprep.subr.bf16.mxu0 0
        %2321 = vmatpush1.bf16.msra.mxu0 0
        %2322 = vmatprep.subr.bf16.mxu0 0
        %2323 = vmatpush1.bf16.msra.mxu0 0
        %2324 = vmatprep.subr.bf16.mxu0 0
        %2325 = vmatpush1.bf16.msra.mxu0 0
        %2326 = vmatprep.subr.bf16.mxu0 0
        %2327 = vmatpush1.bf16.msra.mxu0 0
        %2328 = vmatprep.subr.bf16.mxu0 0
        %2329 = vmatpush1.bf16.msra.mxu0 0
        %2330 = vmatprep.subr.bf16.mxu0 0
        %2331 = vmatpush1.bf16.msra.mxu0 0
        %2332 = vmatprep.subr.bf16.mxu0 0
        %2333 = vmatpush1.bf16.msra.mxu0 0
        %2334 = vmatprep.subr.bf16.mxu0 0
        %2335 = vmatpush1.bf16.msra.mxu0 0
        %2336 = vmatprep.mubr.bf16.mxu0 0
        %2337 = vmatmul.mubr.bf16.gmra.mrb[0].mxu0 %v2232
        %v2338 = vpop.f32.mrb[0].mxu0
        %v2339 = vadd.f32 %v2255, %v2338
        %v2340 = vpop.f32.mrb[0].mxu0
        %v2341 = vpop.f32.mrb[0].mxu0
        %v2342 = vadd.f32 %v2255, %v2341
        %v2343 = vpop.f32.mrb[0].mxu0
        %2344 = vmatprep.mubr.bf16.mxu0 0
        %2345 = vmatmul.mubr.bf16.gmra.mrb[0].mxu0 %v2233
        %v2346 = vpop.f32.mrb[0].mxu0
        %v2347 = vadd.f32 %v2255, %v2346
        %v2348 = vpop.f32.mrb[0].mxu0
        %v2349 = vpop.f32.mrb[0].mxu0
        %v2350 = vadd.f32 %v2255, %v2349
        %v2351 = vpop.f32.mrb[0].mxu0
        %2352 = vmatprep.mubr.bf16.mxu0 0
        %2353 = vmatmul.mubr.bf16.gmra.mrb[0].mxu0 %v2234
        %v2354 = vpop.f32.mrb[0].mxu0
        %v2355 = vadd.f32 %v2255, %v2354
        %v2356 = vpop.f32.mrb[0].mxu0
        %v2357 = vpop.f32.mrb[0].mxu0
        %v2358 = vadd.f32 %v2255, %v2357
        %v2359 = vpop.f32.mrb[0].mxu0
        %2360 = vmatprep.mubr.bf16.mxu0 0
        %2361 = vmatmul.mubr.bf16.gmra.mrb[0].mxu0 %v2235
        %v2362 = vpop.f32.mrb[0].mxu0
        %v2363 = vadd.f32 %v2255, %v2362
        %v2364 = vpop.f32.mrb[0].mxu0
        %v2365 = vpop.f32.mrb[0].mxu0
        %v2366 = vadd.f32 %v2255, %v2365
        %v2367 = vpop.f32.mrb[0].mxu0
        %2368 = vdwg.mxu0
        %v2369 = vmax.f32 %v2339, 0.0
        %v2370 = vmax.f32 %v2342, 0.0
        %v2371 = vmax.f32 %v2347, 0.0
        %v2372 = vmax.f32 %v2350, 0.0
        %v2373 = vmax.f32 %v2355, 0.0
        %v2374 = vmax.f32 %v2358, 0.0
        %v2375 = vmax.f32 %v2363, 0.0
        %v2376 = vmax.f32 %v2366, 0.0
        %v2377 = vlaneseq
        %v2378 = vshrl.u32 %v2377, 7
        %v2379 = vsub.s32 0, %v2378
        %v2380 = vrot.slane %v2085, %v2379
        %v2381 = vmul.f32 %v2369, %v2380
        %v2382 = vmul.f32 %v2370, %v2380
        %v2383 = vmul.f32 %v2371, %v2380
        %v2384 = vmul.f32 %v2372, %v2380
        %v2385 = vmul.f32 %v2373, %v2380
        %v2386 = vmul.f32 %v2374, %v2380
        %v2387 = vmul.f32 %v2375, %v2380
        %v2388 = vmul.f32 %v2376, %v2380
        %2389 = vadd.xlane.f32.xlu0 %v2381
        %v2390 = vpop.xlane.xlu0 %2389
        %2391 = vadd.xlane.f32.xlu0 %v2382
        %v2392 = vpop.xlane.xlu0 %2391
        %2393 = vadd.xlane.f32.xlu0 %v2383
        %v2394 = vpop.xlane.xlu0 %2393
        %2395 = vadd.xlane.f32.xlu0 %v2384
        %v2396 = vpop.xlane.xlu0 %2395
        %2397 = vadd.xlane.f32.xlu0 %v2385
        %v2398 = vpop.xlane.xlu0 %2397
        %2399 = vadd.xlane.f32.xlu0 %v2386
        %v2400 = vpop.xlane.xlu0 %2399
        %2401 = vadd.xlane.f32.xlu0 %v2387
        %v2402 = vpop.xlane.xlu0 %2401
        %2403 = vadd.xlane.f32.xlu0 %v2388
        %v2404 = vpop.xlane.xlu0 %2403
        %v2405 = vlaneseq
        %v2406 = vshrl.u32 %v2405, 7
        %v2407 = vsub.s32 0, %v2406
        %v2408 = vrot.slane %v2086, %v2407
        %v2409 = vadd.f32 %v2390, %v2408
        %v2410 = vadd.f32 %v2392, %v2408
        %v2411 = vadd.f32 %v2394, %v2408
        %v2412 = vadd.f32 %v2396, %v2408
        %v2413 = vadd.f32 %v2398, %v2408
        %v2414 = vadd.f32 %v2400, %v2408
        %v2415 = vadd.f32 %v2402, %v2408
        %v2416 = vadd.f32 %v2404, %v2408
        %vm2417 = vcmask 7168
        %2418 = vst.msk [vmem:[%s330] sm:$0xff] %vm2417, %v2409
        %2419 = vst.msk [vmem:[%s330 + $0x8] sm:$0xff] %vm2417, %v2410
        %2420 = vst.msk [vmem:[%s330 + $0x10] sm:$0xff] %vm2417, %v2411
        %2421 = vst.msk [vmem:[%s330 + $0x18] sm:$0xff] %vm2417, %v2412
        %2422 = vst.msk [vmem:[%s330 + $0x20] sm:$0xff] %vm2417, %v2413
        %2423 = vst.msk [vmem:[%s330 + $0x28] sm:$0xff] %vm2417, %v2414
        %2424 = vst.msk [vmem:[%s330 + $0x30] sm:$0xff] %vm2417, %v2415
        %2425 = vst.msk [vmem:[%s330 + $0x38] sm:$0xff] %vm2417, %v2416
        %s2426 = smul.u32 8, %s22
        %p2427 = scmp.lt.s32.totalorder %s2426, 15
        %s2428 = scalar_select %p2427, %s2426, 15
        %s2429 = smul.addr %s2428, 8
        %s2430 = scalar_lea.vmem %s6, %s2429
        // Predicated region
        $region65: #{tpu_custom_call.1} parent=43 // pred_check
          %p2431 = pneg %p171
        $region66: #{tpu_custom_call.1} parent=43 // pred_check_branch
          %2433 = sbr.rel (%p2431) target = $region68
        $region67: #{tpu_custom_call.1} parent=43 // pred_region
          %s2434 = smul.u32 8, %s22
        $region68: #{tpu_custom_call.1} parent=43 // pred_fallthru
          _
      $region44: #{tpu_custom_call.1} parent=5 // pred_fallthru
        _
      %p2435 = scmp.le.s32.totalorder 2, %s17
      // Predicated region
      $region69: #{tpu_custom_call.1} parent=5 // pred_check
        %p2436 = pneg %p2435
      $region70: #{tpu_custom_call.1} parent=5 // pred_check_branch
        %2438 = sbr.rel (%p2436) target = $region72
      $region71: #{tpu_custom_call.1} parent=5 // pred_region
        %s2439 = ssub.s32 %s17, 2
        // Predicated region
        $region73: #{tpu_custom_call.1} parent=71 // pred_check
          %p2440 = pneg %p177
        $region74: #{tpu_custom_call.1} parent=71 // pred_check_branch
          %2442 = sbr.rel (%p2440) target = $region76
        $region75: #{tpu_custom_call.1} parent=71 // pred_region
          %s2443 = smul.u32 8, %s23
          %p2444 = scmp.lt.s32.totalorder %s2443, 15
          %s2445 = scalar_select %p2444, %s2443, 15
          %s2446 = smul.addr %s2445, 8
          %s2447 = scalar_lea.vmem %s6, %s2446
        $region76: #{tpu_custom_call.1} parent=71 // pred_fallthru
          _
      $region72: #{tpu_custom_call.1} parent=5 // pred_fallthru
        _
    $region6: #{tpu_custom_call.1} parent=1 // loop_footer
      %s21 = sadd.s32 1, %s17
    $region7: #{tpu_custom_call.1} parent=1 // loop_footer_branch
      %16 = sbr.rel target = $region3
    $region8: #{tpu_custom_call.1} parent=1 // loop_exit
      _
    %2448 = vsyncpa [#allocation3], 1
    %s2449 = scalar_lea.sflag [#allocation3], 1
    %2450 = vsyncpa %s2449, 1
    %2451 = vsyncpa [#allocation5], 1
    %2452 = vsyncpa [#allocation8], 1

</llo_original>
